<compile_context>
chip_gen: v7x
topology: tpu7x:2x2x1
jax: 0.10.0
libtpu: 0.0.40
codegen_flags: <defaults>
</compile_context>

<pallas_src>
import math
import functools

import jax
import jax.numpy as jnp
from jax.experimental import pallas as pl
from jax.experimental.pallas import tpu as pltpu

D_MODEL = 512
NUM_HEADS = 8
HEAD_DIM = D_MODEL // NUM_HEADS  # 64


# ----------------------------- Pallas kernels -----------------------------

def linear_kernel(x_ref, w_ref, b_ref, o_ref):
    # x_ref: (tm, K) bf16, w_ref: (K, N) bf16 (pre-transposed from PyTorch (N, K)),
    # b_ref: (1, N) f32, o_ref: (tm, N).  f32 accumulation on the MXU.
    acc = jnp.dot(x_ref[...], w_ref[...], preferred_element_type=jnp.float32)
    o_ref[...] = (acc + b_ref[...]).astype(o_ref.dtype)


def attn_kernel(*refs, scale, num_heads, head_dim, d_model, has_mask):
    # One grid step == one batch element, all heads.
    #   qkv_ref : (1, S, 3*d_model) bf16   fused [q | k | v] projection output
    #   mask_ref: (1, H, S, S) f32         additive mask bias (only if has_mask)
    #   o_ref   : (1, S, d_model)  bf16    attention output, head-major (lane-dense store)
    #   attn_ref: (1, H, S, S) f32         attention probabilities (module returns them)
    if has_mask:
        qkv_ref, mask_ref, o_ref, attn_ref = refs
    else:
        qkv_ref, o_ref, attn_ref = refs
        mask_ref = None

    outs = []
    for h in range(num_heads):  # static unroll; back-to-back MXU matmuls in one step
        q = qkv_ref[0, :, pl.ds(h * head_dim, head_dim)]                  # (S, D) bf16
        k = qkv_ref[0, :, pl.ds(d_model + h * head_dim, head_dim)]        # (S, D) bf16
        v = qkv_ref[0, :, pl.ds(2 * d_model + h * head_dim, head_dim)]    # (S, D) bf16

        # scores = q @ k^T expressed as a contraction over the last dims (no .T copy).
        s = jax.lax.dot_general(
            q, k, (((1,), (1,)), ((), ())),
            preferred_element_type=jnp.float32) * scale                   # (S, S) f32
        if has_mask:
            s = s + mask_ref[0, h]

        # numerically-stable softmax in f32
        s = s - jnp.max(s, axis=-1, keepdims=True)
        p = jnp.exp(s)
        a = p * pl.reciprocal(jnp.sum(p, axis=-1, keepdims=True), approx=True)

        attn_ref[0, h] = a  # f32; only materialized because the module returns it

        out_h = jax.lax.dot_general(
            a.astype(v.dtype), v, (((1,), (0,)), ((), ())),
            preferred_element_type=jnp.float32)                           # (S, D) f32
        outs.append(out_h)

    # Single lane-dense (S, d_model) store, already head-major -> no transpose in glue.
    o_ref[0] = jnp.concatenate(outs, axis=-1).astype(o_ref.dtype)


# ----------------------------- wrappers -----------------------------

def _tile_m(M, target=256):
    """Pick an M tile: <= target, multiple of 8, and >=2 grid steps when M allows."""
    if M <= 8:
        return M
    if M <= target:
        return M // 2 if (M % 16 == 0) else M
    return target


def pallas_linear(x2d, w_t, b, out_dtype=jnp.float32, target_tm=256):
    """x2d: (M, K) bf16, w_t: (K, N) bf16, b: (N,) f32 -> (M, N) out_dtype."""
    M, K = x2d.shape
    N = w_t.shape[1]
    tm = _tile_m(M, target_tm)
    return pl.pallas_call(
        linear_kernel,
        out_shape=jax.ShapeDtypeStruct((M, N), out_dtype),
        grid=(pl.cdiv(M, tm),),
        in_specs=[
            pl.BlockSpec((tm, K), lambda i: (i, 0)),
            pl.BlockSpec((K, N), lambda i: (0, 0)),   # weights resident across steps
            pl.BlockSpec((1, N), lambda i: (0, 0)),
        ],
        out_specs=pl.BlockSpec((tm, N), lambda i: (i, 0)),
        compiler_params=pltpu.CompilerParams(dimension_semantics=("parallel",)),
    )(x2d, w_t, b.reshape(1, N).astype(jnp.float32))


def pallas_attention(qkv, mask_bias, num_heads, head_dim):
    """qkv: (B, S, 3*d_model) bf16, mask_bias: (B, H, S, S) f32 or None.

    Returns (att_out (B, S, d_model) bf16, attn (B, H, S, S) f32)."""
    B, S, three_d = qkv.shape
    d_model = three_d // 3
    H = num_heads
    kernel = functools.partial(
        attn_kernel,
        scale=1.0 / math.sqrt(head_dim),
        num_heads=H, head_dim=head_dim, d_model=d_model,
        has_mask=mask_bias is not None)

    in_specs = [pl.BlockSpec((1, S, three_d), lambda b: (b, 0, 0))]
    args = [qkv]
    if mask_bias is not None:
        in_specs.append(pl.BlockSpec((1, H, S, S), lambda b: (b, 0, 0, 0)))
        args.append(mask_bias)

    return pl.pallas_call(
        kernel,
        out_shape=(
            jax.ShapeDtypeStruct((B, S, d_model), jnp.bfloat16),
            jax.ShapeDtypeStruct((B, H, S, S), jnp.float32),
        ),
        grid=(B,),
        in_specs=in_specs,
        out_specs=(
            pl.BlockSpec((1, S, d_model), lambda b: (b, 0, 0)),
            pl.BlockSpec((1, H, S, S), lambda b: (b, 0, 0, 0)),
        ),
        compiler_params=pltpu.CompilerParams(dimension_semantics=("parallel",)),
    )(*args)


def init_params(key, d_model=D_MODEL):
    # Deterministic synthetic parameters (PyTorch nn.Linear stores W as (out, in)).
    keys = jax.random.split(key, 8)

    def lin(kw, kb):
        w = jax.random.normal(kw, (d_model, d_model), jnp.float32) * 0.02
        b = jax.random.normal(kb, (d_model,), jnp.float32) * 0.02
        return w, b

    wq, bq = lin(keys[0], keys[1])
    wk, bk = lin(keys[2], keys[3])
    wv, bv = lin(keys[4], keys[5])
    wo, bo = lin(keys[6], keys[7])
    return dict(wq=wq, bq=bq, wk=wk, bk=bk, wv=wv, bv=bv, wo=wo, bo=bo)


def multi_head_attention(x, params, mask=None, num_heads=NUM_HEADS):
    """x: (B, S, d_model) f32, mask: optional, broadcastable to (B, H, S, S),
    0 == masked (PyTorch masked_fill(mask == 0, -1e9) semantics).

    Returns (output (B, S, d_model) f32, attn (B, H, S, S) f32)."""
    B, S, d_model = x.shape
    head_dim = d_model // num_heads

    # Fused q/k/v projection weights (glue; in a real model precompute once).
    w_qkv_t = jnp.concatenate(
        [params["wq"].T, params["wk"].T, params["wv"].T], axis=1
    ).astype(jnp.bfloat16)                                   # (d_model, 3*d_model)
    b_qkv = jnp.concatenate([params["bq"], params["bk"], params["bv"]])

    x2d = x.reshape(B * S, d_model).astype(jnp.bfloat16)
    qkv2d = pallas_linear(x2d, w_qkv_t, b_qkv, out_dtype=jnp.bfloat16)   # (B*S, 3*d_model)
    qkv = qkv2d.reshape(B, S, 3 * d_model)                   # free reshape, no transpose

    if mask is not None:
        m = jnp.broadcast_to(jnp.asarray(mask), (B, num_heads, S, S))
        mask_bias = jnp.where(m == 0, jnp.float32(-1e9), jnp.float32(0.0))
    else:
        mask_bias = None

    att_out, attn = pallas_attention(qkv, mask_bias, num_heads, head_dim)

    out2d = pallas_linear(
        att_out.reshape(B * S, d_model),                      # free reshape (head-major)
        params["wo"].T.astype(jnp.bfloat16), params["bo"],
        out_dtype=jnp.float32)
    return out2d.reshape(B, S, d_model), attn


# ----------------------------- reference (pure JAX, f32) -----------------------------

def reference_mha(x, params, mask=None, num_heads=NUM_HEADS):
    B, S, d_model = x.shape
    head_dim = d_model // num_heads

    def lin(t, w, b):
        return t @ w.T + b

    def split(t):
        return t.reshape(B, S, num_heads, head_dim).transpose(0, 2, 1, 3)

    q = split(lin(x, params["wq"], params["bq"]))
    k = split(lin(x, params["wk"], params["bk"]))
    v = split(lin(x, params["wv"], params["bv"]))
    scores = jnp.einsum("bhqd,bhkd->bhqk", q, k) / math.sqrt(head_dim)
    if mask is not None:
        scores = jnp.where(jnp.broadcast_to(mask, scores.shape) == 0, -1e9, scores)
    attn = jax.nn.softmax(scores, axis=-1)
    out = jnp.einsum("bhqk,bhkd->bhqd", attn, v)
    out = out.transpose(0, 2, 1, 3).reshape(B, S, d_model)
    out = lin(out, params["wo"], params["bo"])
    return out, attn


# ----------------------------- main -----------------------------

if __name__ == "__main__":
    key = jax.random.PRNGKey(0)
    kx, kp = jax.random.split(key)

    B, S = 2, 8
    x = jax.random.normal(kx, (B, S, D_MODEL), jnp.float32)
    params = init_params(kp)

    # --- mask=None path ---
    out, attn = multi_head_attention(x, params)
    out = jax.block_until_ready(out)
    attn = jax.block_until_ready(attn)

    ref_out, ref_attn = reference_mha(x, params)
    assert out.shape == (B, S, D_MODEL) and attn.shape == (B, NUM_HEADS, S, S)
    # Tolerances loosened because the MXU operands are bf16 (f32 accumulation).
    assert jnp.allclose(out, ref_out, atol=5e-2, rtol=5e-2)
    assert jnp.allclose(attn, ref_attn, atol=1e-2, rtol=1e-2)

    # --- causal-mask path (mask == 0 -> masked) ---
    causal = jnp.tril(jnp.ones((S, S), jnp.int32))[None, None, :, :]   # (1, 1, S, S)
    out_m, attn_m = multi_head_attention(x, params, mask=causal)
    out_m = jax.block_until_ready(out_m)
    attn_m = jax.block_until_ready(attn_m)

    ref_out_m, ref_attn_m = reference_mha(x, params, mask=causal)
    assert jnp.allclose(out_m, ref_out_m, atol=5e-2, rtol=5e-2)
    assert jnp.allclose(attn_m, ref_attn_m, atol=1e-2, rtol=1e-2)

    print("KERNEL_OK")
</pallas_src>

<mosaic_0001>
module attributes {stable_mosaic.version = 11 : i64} {
  func.func @linear_kernel(%arg0: i32, %arg1: memref<8x512xbf16, #tpu.memory_space<vmem>>, %arg2: memref<512x1536xbf16, #tpu.memory_space<vmem>>, %arg3: memref<1x1536xf32, #tpu.memory_space<vmem>>, %arg4: memref<8x1536xbf16, #tpu.memory_space<vmem>>) attributes {dimension_semantics = [#tpu.dimension_semantics<parallel>], iteration_bounds = array<i64: 2>, scalar_prefetch = 0 : i64, scratch_operands = 0 : i64, tpu.core_type = #tpu.core_type<tc>, window_params = [{transform_indices = @transform_0, window_bounds = array<i64: 8, 512>}, {pipeline_mode = #tpu.pipeline_mode<synchronous>, transform_indices = @transform_1, window_bounds = array<i64: 512, 1536>}, {pipeline_mode = #tpu.pipeline_mode<synchronous>, transform_indices = @transform_2, window_bounds = array<i64: 1, 1536>}, {transform_indices = @transform_3, window_bounds = array<i64: 8, 1536>}]} {
    %c0 = arith.constant 0 : index
    %c0_0 = arith.constant 0 : index
    %0 = vector.load %arg1[%c0, %c0_0] : memref<8x512xbf16, #tpu.memory_space<vmem>>, vector<8x512xbf16>
    %c0_1 = arith.constant 0 : index
    %c0_2 = arith.constant 0 : index
    %1 = vector.load %arg2[%c0_1, %c0_2] : memref<512x1536xbf16, #tpu.memory_space<vmem>>, vector<512x1536xbf16>
    %cst = arith.constant dense<0.000000e+00> : vector<8x1536xf32>
    %2 = tpu.matmul %0, %1, %cst {dimension_numbers = #tpu.dot_dimension_numbers<[1], [0], [0], [1], [0, 0, 1, 1], [], []>} : vector<8x512xbf16>, vector<512x1536xbf16>, vector<8x1536xf32> -> vector<8x1536xf32>
    %c0_3 = arith.constant 0 : index
    %c0_4 = arith.constant 0 : index
    %3 = vector.load %arg3[%c0_3, %c0_4] : memref<1x1536xf32, #tpu.memory_space<vmem>>, vector<1x1536xf32>
    %4 = vector.broadcast %3 : vector<1x1536xf32> to vector<8x1536xf32>
    %5 = arith.addf %2, %4 : vector<8x1536xf32>
    %6 = arith.truncf %5 : vector<8x1536xf32> to vector<8x1536xbf16>
    %c0_5 = arith.constant 0 : index
    %c0_6 = arith.constant 0 : index
    %7 = vector.load %arg4[%c0_5, %c0_6] : memref<8x1536xbf16, #tpu.memory_space<vmem>>, vector<8x1536xbf16>
    tpu.vector_store %arg4[%c0_5, %c0_6], %6 {strides = array<i32>} : memref<8x1536xbf16, #tpu.memory_space<vmem>>, vector<8x1536xbf16>,
    return
  }
  func.func @transform_0(%arg0: i32) -> (i32, i32) {
    %c0_i32 = arith.constant 0 : i32
    %c0_i32_0 = arith.constant 0 : i32
    return %arg0, %c0_i32 : i32, i32
  }
  func.func @transform_1(%arg0: i32) -> (i32, i32) {
    %c0_i32 = arith.constant 0 : i32
    %c0_i32_0 = arith.constant 0 : i32
    %c0_i32_1 = arith.constant 0 : i32
    return %c0_i32, %c0_i32_0 : i32, i32
  }
  func.func @transform_2(%arg0: i32) -> (i32, i32) {
    %c0_i32 = arith.constant 0 : i32
    %c0_i32_0 = arith.constant 0 : i32
    %c0_i32_1 = arith.constant 0 : i32
    return %c0_i32, %c0_i32_0 : i32, i32
  }
  func.func @transform_3(%arg0: i32) -> (i32, i32) {
    %c0_i32 = arith.constant 0 : i32
    %c0_i32_0 = arith.constant 0 : i32
    return %arg0, %c0_i32 : i32, i32
  }
}

</mosaic_0001>

<llo_original>
// kernel: tpu_custom_call.1
$region0: #{tpu_custom_call.1}
  #allocation0 [shape = 'u32[]', space=smem, size = 0x4, offset = 0x4, fixed_abs, tag = 'smem constant byte address 0x4 - core index']
  #allocation1 [shape = 'u32[144,128]{1,0:T(1,128)}', space=vmem, size = 0x12000, scoped, tag = 'internal scratch']
  %s0 = inlined_call_operand.hbm [shape: bf16[16,512], index: 0, kind: input, shape index: {}]
  %s1 = inlined_call_operand.hbm [shape: bf16[512,1536], index: 1, kind: input, shape index: {}]
  %s2 = inlined_call_operand.hbm [shape: f32[1,1536], index: 2, kind: input, shape index: {}]
  %s3 = inlined_call_operand.hbm [shape: bf16[16,1536], index: 3, kind: output, shape index: {}]
  %s4 = sld [smem:[#allocation0]]
  $region57: #{tpu_custom_call.1} parent=0
    _
  %s6 = ssub.s32 1, %s4
  %s7 = scalar_select 0, %s6, %s4
  $region1: #{tpu_custom_call.1} parent=0
    #allocation2 [shape = 'u8[16384]{0}', space=vmem, size = 0x4000, scoped, tag = 'input window, operand 0']
    #allocation3 [shape = 's32[2]{0}', space=sflag, size = 0x8, scoped, tag = 'scoped memory for tpu_custom_call.1']
    #allocation4 [shape = 's32[2]{0}', space=sflag, size = 0x8, scoped, tag = 'scoped memory for tpu_custom_call.1']
    #allocation5 [shape = 'u8[1572864]{0}', space=vmem, size = 0x180000, scoped, tag = 'input window, operand 1, single buffered']
    #allocation6 [shape = 's32[1]{0}', space=sflag, size = 0x4, scoped, tag = 'scoped memory for tpu_custom_call.1']
    #allocation7 [shape = 'u8[6144]{0}', space=vmem, size = 0x1800, scoped, tag = 'input window, operand 2, single buffered']
    #allocation8 [shape = 'u8[49152]{0}', space=vmem, size = 0xc000, scoped, tag = 'output window, operand 0']
    %8 = vsyncpa [#allocation3], 0
    %s9 = scalar_lea.sflag [#allocation3], 1
    %10 = vsyncpa %s9, 0
    %11 = vsyncpa [#allocation6], 0
    %12 = vsyncpa [#allocation4], 0
    %s13 = scalar_lea.sflag [#allocation4], 1
    %14 = vsyncpa %s13, 0
    loop: start=0, step=1, limit=4
    $region2: #{tpu_custom_call.1} parent=1 // loop_pre_header
      _
    $region3: #{tpu_custom_call.1} parent=1 // loop_header
      %s16 = sphi 0, %s20
      %p17 = scmp.ge.s32.totalorder %s16, 4
      %s26 = sphi 0, %s28
      %s29 = sphi 0, %s26
      %s30 = sphi 0, %s29
      %s46 = sphi 0, %s30
      %s50 = sphi 0, %s50
      %s52 = sphi 0, %s50
      %s53 = sphi 0, %s52
      %s67 = sphi 0, %s53
      %s71 = sphi 0, %s71
      %s73 = sphi 0, %s71
      %s74 = sphi 0, %s73
      %s88 = sphi 0, %s74
      %s94 = sphi 0, %s96
      %s97 = sphi 0, %s94
      %s98 = sphi 0, %s97
      %s114 = sphi 0, %s98
    $region4: #{tpu_custom_call.1} parent=1 // loop_header_branch
      %19 = sbr.rel (%p17) target = $region8
    $region5: #{tpu_custom_call.1} parent=1 // loop_body
      %s21 = ssub.s32 %s16, 1
      %s22 = ssub.s32 %s16, 2
      %s23 = sadd.s32 %s16, 1
      %s24 = ssub.s32 %s16, %s23
      %p25 = scmp.eq.s32.totalorder %s24, 0
      %s27 = sadd.s32 %s26, 1
      %s28 = scalar_select %p25, %s26, %s27
      %p31 = pneg %p25
      %p32 = scmp.eq.s32.totalorder %s16, 1
      %p33 = por %p31, %p32
      %p34 = scmp.ne.s32.totalorder %s26, %s29
      %p35 = scmp.eq.s32.totalorder %s16, 0
      %p36 = por %p34, %p35
      %p37 = scmp.ne.s32.totalorder %s26, %s29
      %p38 = scmp.eq.s32.totalorder %s21, 1
      %p39 = por %p37, %p38
      %p40 = scmp.ne.s32.totalorder %s29, %s30
      %p41 = scmp.eq.s32.totalorder %s21, 0
      %p42 = por %p40, %p41
      %p43 = scmp.ne.s32.totalorder %s29, %s30
      %p44 = scmp.eq.s32.totalorder %s22, 1
      %p45 = por %p43, %p44
      %p47 = scmp.ne.s32.totalorder %s30, %s46
      %p48 = scmp.eq.s32.totalorder %s22, 0
      %p49 = por %p47, %p48
      %s51 = sadd.s32 %s50, 1
      %p54 = scmp.eq.s32.totalorder %s16, 1
      %p55 = scmp.ne.s32.totalorder %s50, %s52
      %p56 = scmp.eq.s32.totalorder %s16, 0
      %p57 = por %p55, %p56
      %p58 = scmp.ne.s32.totalorder %s50, %s52
      %p59 = scmp.eq.s32.totalorder %s21, 1
      %p60 = por %p58, %p59
      %p61 = scmp.ne.s32.totalorder %s52, %s53
      %p62 = scmp.eq.s32.totalorder %s21, 0
      %p63 = por %p61, %p62
      %p64 = scmp.ne.s32.totalorder %s52, %s53
      %p65 = scmp.eq.s32.totalorder %s22, 1
      %p66 = por %p64, %p65
      %p68 = scmp.ne.s32.totalorder %s53, %s67
      %p69 = scmp.eq.s32.totalorder %s22, 0
      %p70 = por %p68, %p69
      %s72 = sadd.s32 %s71, 1
      %p75 = scmp.eq.s32.totalorder %s16, 1
      %p76 = scmp.ne.s32.totalorder %s71, %s73
      %p77 = scmp.eq.s32.totalorder %s16, 0
      %p78 = por %p76, %p77
      %p79 = scmp.ne.s32.totalorder %s71, %s73
      %p80 = scmp.eq.s32.totalorder %s21, 1
      %p81 = por %p79, %p80
      %p82 = scmp.ne.s32.totalorder %s73, %s74
      %p83 = scmp.eq.s32.totalorder %s21, 0
      %p84 = por %p82, %p83
      %p85 = scmp.ne.s32.totalorder %s73, %s74
      %p86 = scmp.eq.s32.totalorder %s22, 1
      %p87 = por %p85, %p86
      %p89 = scmp.ne.s32.totalorder %s74, %s88
      %p90 = scmp.eq.s32.totalorder %s22, 0
      %p91 = por %p89, %p90
      %s92 = ssub.s32 %s16, %s23
      %p93 = scmp.eq.s32.totalorder %s92, 0
      %s95 = sadd.s32 %s94, 1
      %s96 = scalar_select %p93, %s94, %s95
      %p99 = pneg %p93
      %p100 = scmp.eq.s32.totalorder %s16, 1
      %p101 = por %p99, %p100
      %p102 = scmp.ne.s32.totalorder %s94, %s97
      %p103 = scmp.eq.s32.totalorder %s16, 0
      %p104 = por %p102, %p103
      %p105 = scmp.ne.s32.totalorder %s94, %s97
      %p106 = scmp.eq.s32.totalorder %s21, 1
      %p107 = por %p105, %p106
      %p108 = scmp.ne.s32.totalorder %s97, %s98
      %p109 = scmp.eq.s32.totalorder %s21, 0
      %p110 = por %p108, %p109
      %p111 = scmp.ne.s32.totalorder %s97, %s98
      %p112 = scmp.eq.s32.totalorder %s22, 1
      %p113 = por %p111, %p112
      %p115 = scmp.ne.s32.totalorder %s98, %s114
      %p116 = scmp.eq.s32.totalorder %s22, 0
      %p117 = por %p115, %p116
      %p118 = scmp.le.s32.totalorder 1, %s16
      %p119 = scmp.lt.s32.totalorder %s16, 3
      %p120 = pnand %p118, %p119
      %p121 = pneg %p120
      // Predicated region
      $region9: #{tpu_custom_call.1} parent=5 // pred_check
        _
      $region10: #{tpu_custom_call.1} parent=5 // pred_check_branch
        %123 = sbr.rel (%p120) target = $region12
      $region11: #{tpu_custom_call.1} parent=5 // pred_region
        %s124 = ssub.s32 %s16, 1
        // Predicated region
        $region13: #{tpu_custom_call.1} parent=11 // pred_check
          %p125 = pneg %p63
        $region14: #{tpu_custom_call.1} parent=11 // pred_check_branch
          %127 = sbr.rel (%p125) target = $region16
        $region15: #{tpu_custom_call.1} parent=11 // pred_region
          %s129 = ssub.s32 49152, 49152
          %130 = vsyncadd [#allocation6], %s129
          %s131 = sshll.u32 [#allocation5], 4
          %s132 = int_to_ptr.vmem [resolvable:$true] %s131
          %137 = dma.hbm_to_vmem [thread:$0]  %s1, 49152, %s132, [#allocation6], 768, 768, 48
        $region16: #{tpu_custom_call.1} parent=11 // pred_fallthru
          _
        // Predicated region
        $region17: #{tpu_custom_call.1} parent=11 // pred_check
          %p138 = pneg %p84
        $region18: #{tpu_custom_call.1} parent=11 // pred_check_branch
          %140 = sbr.rel (%p138) target = $region20
        $region19: #{tpu_custom_call.1} parent=11 // pred_region
          %s142 = ssub.s32 192, 192
          %143 = vsyncadd [#allocation6], %s142
          %s145 = sshll.u32 [#allocation7], 4
          %s146 = int_to_ptr.vmem [resolvable:$true] %s145
          %148 = dma.hbm_to_vmem [thread:$0]  %s2, 192, %s146, [#allocation6]
        $region20: #{tpu_custom_call.1} parent=11 // pred_fallthru
          _
      $region12: #{tpu_custom_call.1} parent=5 // pred_fallthru
        _
      %p149 = scmp.lt.s32.totalorder %s16, 2
      // Predicated region
      $region21: #{tpu_custom_call.1} parent=5 // pred_check
        %p150 = pneg %p149
      $region22: #{tpu_custom_call.1} parent=5 // pred_check_branch
        %152 = sbr.rel (%p150) target = $region24
      $region23: #{tpu_custom_call.1} parent=5 // pred_region
        // Predicated region
        $region25: #{tpu_custom_call.1} parent=23 // pred_check
          %p153 = pneg %p36
        $region26: #{tpu_custom_call.1} parent=23 // pred_check_branch
          %155 = sbr.rel (%p153) target = $region28
        $region27: #{tpu_custom_call.1} parent=23 // pred_region
          %s156 = sand.u32 %s26, 1
          %s157 = scalar_lea.sflag [#allocation3], %s156
          %s158 = sand.u32 %s26, 1
          %s159 = smul.addr %s158, 16
          %s160 = scalar_lea.vmem [#allocation2], %s159
          %s162 = ssub.s32 256, 256
          %163 = vsyncadd %s157, %s162
          %s164 = smul.addr %s16, 4
          %s165 = smul.addr %s164, 64
          %s166 = scalar_lea.hbm %s0, %s165
          %s168 = sshll.u32 %s160, 4
          %s169 = int_to_ptr.vmem [resolvable:$true] %s168
          %171 = dma.hbm_to_vmem [thread:$0]  %s166, 256, %s169, %s157
        $region28: #{tpu_custom_call.1} parent=23 // pred_fallthru
          _
      $region24: #{tpu_custom_call.1} parent=5 // pred_fallthru
        _
      %p172 = scmp.le.s32.totalorder 1, %s16
      %p173 = scmp.lt.s32.totalorder %s16, 3
      %p174 = pnand %p172, %p173
      %p175 = pneg %p174
      // Predicated region
      $region29: #{tpu_custom_call.1} parent=5 // pred_check
        _
      $region30: #{tpu_custom_call.1} parent=5 // pred_check_branch
        %177 = sbr.rel (%p174) target = $region32
      $region31: #{tpu_custom_call.1} parent=5 // pred_region
        %s178 = ssub.s32 %s16, 1
        %s179 = sand.u32 %s29, 1
        %s180 = scalar_lea.sflag [#allocation3], %s179
        %s181 = sand.u32 %s29, 1
        %s182 = smul.addr %s181, 16
        %s183 = scalar_lea.vmem [#allocation2], %s182
        // Predicated region
        $region33: #{tpu_custom_call.1} parent=31 // pred_check
          %p184 = pneg %p42
        $region34: #{tpu_custom_call.1} parent=31 // pred_check_branch
          %186 = sbr.rel (%p184) target = $region36
        $region35: #{tpu_custom_call.1} parent=31 // pred_region
          %187 = dma.done %s180, 256
        $region36: #{tpu_custom_call.1} parent=31 // pred_fallthru
          _
        // Predicated region
        $region37: #{tpu_custom_call.1} parent=31 // pred_check
          %p188 = pneg %p63
        $region38: #{tpu_custom_call.1} parent=31 // pred_check_branch
          %190 = sbr.rel (%p188) target = $region40
        $region39: #{tpu_custom_call.1} parent=31 // pred_region
          %191 = dma.done [#allocation6], 49152
        $region40: #{tpu_custom_call.1} parent=31 // pred_fallthru
          _
        // Predicated region
        $region41: #{tpu_custom_call.1} parent=31 // pred_check
          %p192 = pneg %p84
        $region42: #{tpu_custom_call.1} parent=31 // pred_check_branch
          %194 = sbr.rel (%p192) target = $region44
        $region43: #{tpu_custom_call.1} parent=31 // pred_region
          %195 = dma.done [#allocation6], 192
        $region44: #{tpu_custom_call.1} parent=31 // pred_fallthru
          _
        %s196 = sand.u32 %s29, 1
        %s197 = scalar_lea.sflag [#allocation3], %s196
        %s198 = sand.u32 %s29, 1
        %s199 = smul.addr %s198, 16
        %s200 = scalar_lea.vmem [#allocation2], %s199
        %p201 = pneg %p42
        %p202 = pneg %p39
        %p203 = pneg %p63
        %p204 = pneg %p60
        %p205 = pneg %p84
        %p206 = pneg %p81
        %p207 = pneg %p110
        %p208 = pneg %p107
        %s209 = sand.u32 %s97, 1
        %s210 = scalar_lea.sflag [#allocation4], %s209
        %s211 = sand.u32 %s97, 1
        %s212 = smul.addr %s211, 48
        %s213 = scalar_lea.vmem [#allocation8], %s212
        %v214 = vld [vmem:[%s183] sm:$0xff]
        %v215 = vld [vmem:[%s183 + $0x8] sm:$0xff]
        %v216 = vld [vmem:[#allocation5] sm:$0xff]
        %v217 = vld [vmem:[#allocation5 + $0x8] sm:$0xff]
        %v218 = vld [vmem:[#allocation5 + $0x10] sm:$0xff]
        %v219 = vld [vmem:[#allocation5 + $0x18] sm:$0xff]
        %v220 = vld [vmem:[#allocation5 + $0x20] sm:$0xff]
        %v221 = vld [vmem:[#allocation5 + $0x28] sm:$0xff]
        %v222 = vld [vmem:[#allocation5 + $0x30] sm:$0xff]
        %v223 = vld [vmem:[#allocation5 + $0x38] sm:$0xff]
        %v224 = vld [vmem:[#allocation5 + $0x40] sm:$0xff]
        %v225 = vld [vmem:[#allocation5 + $0x48] sm:$0xff]
        %v226 = vld [vmem:[#allocation5 + $0x50] sm:$0xff]
        %v227 = vld [vmem:[#allocation5 + $0x58] sm:$0xff]
        %v228 = vld [vmem:[#allocation5 + $0x60] sm:$0xff]
        %v229 = vld [vmem:[#allocation5 + $0x68] sm:$0xff]
        %v230 = vld [vmem:[#allocation5 + $0x70] sm:$0xff]
        %v231 = vld [vmem:[#allocation5 + $0x78] sm:$0xff]
        %v232 = vld [vmem:[#allocation5 + $0x80] sm:$0xff]
        %v233 = vld [vmem:[#allocation5 + $0x88] sm:$0xff]
        %v234 = vld [vmem:[#allocation5 + $0x90] sm:$0xff]
        %v235 = vld [vmem:[#allocation5 + $0x98] sm:$0xff]
        %v236 = vld [vmem:[#allocation5 + $0xa0] sm:$0xff]
        %v237 = vld [vmem:[#allocation5 + $0xa8] sm:$0xff]
        %v238 = vld [vmem:[#allocation5 + $0xb0] sm:$0xff]
        %v239 = vld [vmem:[#allocation5 + $0xb8] sm:$0xff]
        %v240 = vld [vmem:[#allocation5 + $0xc0] sm:$0xff]
        %v241 = vld [vmem:[#allocation5 + $0xc8] sm:$0xff]
        %v242 = vld [vmem:[#allocation5 + $0xd0] sm:$0xff]
        %v243 = vld [vmem:[#allocation5 + $0xd8] sm:$0xff]
        %v244 = vld [vmem:[#allocation5 + $0xe0] sm:$0xff]
        %v245 = vld [vmem:[#allocation5 + $0xe8] sm:$0xff]
        %v246 = vld [vmem:[#allocation5 + $0xf0] sm:$0xff]
        %v247 = vld [vmem:[#allocation5 + $0xf8] sm:$0xff]
        %v248 = vld [vmem:[#allocation5 + $0x100] sm:$0xff]
        %v249 = vld [vmem:[#allocation5 + $0x108] sm:$0xff]
        %v250 = vld [vmem:[#allocation5 + $0x110] sm:$0xff]
        %v251 = vld [vmem:[#allocation5 + $0x118] sm:$0xff]
        %v252 = vld [vmem:[#allocation5 + $0x120] sm:$0xff]
        %v253 = vld [vmem:[#allocation5 + $0x128] sm:$0xff]
        %v254 = vld [vmem:[#allocation5 + $0x130] sm:$0xff]
        %v255 = vld [vmem:[#allocation5 + $0x138] sm:$0xff]
        %v256 = vld [vmem:[#allocation5 + $0x140] sm:$0xff]
        %v257 = vld [vmem:[#allocation5 + $0x148] sm:$0xff]
        %v258 = vld [vmem:[#allocation5 + $0x150] sm:$0xff]
        %v259 = vld [vmem:[#allocation5 + $0x158] sm:$0xff]
        %v260 = vld [vmem:[#allocation5 + $0x160] sm:$0xff]
        %v261 = vld [vmem:[#allocation5 + $0x168] sm:$0xff]
        %v262 = vld [vmem:[#allocation5 + $0x170] sm:$0xff]
        %v263 = vld [vmem:[#allocation5 + $0x178] sm:$0xff]
        %v264 = vld [vmem:[#allocation5 + $0x180] sm:$0xff]
        %v265 = vld [vmem:[#allocation5 + $0x188] sm:$0xff]
        %v266 = vld [vmem:[#allocation5 + $0x190] sm:$0xff]
        %v267 = vld [vmem:[#allocation5 + $0x198] sm:$0xff]
        %v268 = vld [vmem:[#allocation5 + $0x1a0] sm:$0xff]
        %v269 = vld [vmem:[#allocation5 + $0x1a8] sm:$0xff]
        %v270 = vld [vmem:[#allocation5 + $0x1b0] sm:$0xff]
        %v271 = vld [vmem:[#allocation5 + $0x1b8] sm:$0xff]
        %v272 = vld [vmem:[#allocation5 + $0x1c0] sm:$0xff]
        %v273 = vld [vmem:[#allocation5 + $0x1c8] sm:$0xff]
        %v274 = vld [vmem:[#allocation5 + $0x1d0] sm:$0xff]
        %v275 = vld [vmem:[#allocation5 + $0x1d8] sm:$0xff]
        %v276 = vld [vmem:[#allocation5 + $0x1e0] sm:$0xff]
        %v277 = vld [vmem:[#allocation5 + $0x1e8] sm:$0xff]
        %v278 = vld [vmem:[#allocation5 + $0x1f0] sm:$0xff]
        %v279 = vld [vmem:[#allocation5 + $0x1f8] sm:$0xff]
        %v280 = vld [vmem:[#allocation5 + $0x200] sm:$0xff]
        %v281 = vld [vmem:[#allocation5 + $0x208] sm:$0xff]
        %v282 = vld [vmem:[#allocation5 + $0x210] sm:$0xff]
        %v283 = vld [vmem:[#allocation5 + $0x218] sm:$0xff]
        %v284 = vld [vmem:[#allocation5 + $0x220] sm:$0xff]
        %v285 = vld [vmem:[#allocation5 + $0x228] sm:$0xff]
        %v286 = vld [vmem:[#allocation5 + $0x230] sm:$0xff]
        %v287 = vld [vmem:[#allocation5 + $0x238] sm:$0xff]
        %v288 = vld [vmem:[#allocation5 + $0x240] sm:$0xff]
        %v289 = vld [vmem:[#allocation5 + $0x248] sm:$0xff]
        %v290 = vld [vmem:[#allocation5 + $0x250] sm:$0xff]
        %v291 = vld [vmem:[#allocation5 + $0x258] sm:$0xff]
        %v292 = vld [vmem:[#allocation5 + $0x260] sm:$0xff]
        %v293 = vld [vmem:[#allocation5 + $0x268] sm:$0xff]
        %v294 = vld [vmem:[#allocation5 + $0x270] sm:$0xff]
        %v295 = vld [vmem:[#allocation5 + $0x278] sm:$0xff]
        %v296 = vld [vmem:[#allocation5 + $0x280] sm:$0xff]
        %v297 = vld [vmem:[#allocation5 + $0x288] sm:$0xff]
        %v298 = vld [vmem:[#allocation5 + $0x290] sm:$0xff]
        %v299 = vld [vmem:[#allocation5 + $0x298] sm:$0xff]
        %v300 = vld [vmem:[#allocation5 + $0x2a0] sm:$0xff]
        %v301 = vld [vmem:[#allocation5 + $0x2a8] sm:$0xff]
        %v302 = vld [vmem:[#allocation5 + $0x2b0] sm:$0xff]
        %v303 = vld [vmem:[#allocation5 + $0x2b8] sm:$0xff]
        %v304 = vld [vmem:[#allocation5 + $0x2c0] sm:$0xff]
        %v305 = vld [vmem:[#allocation5 + $0x2c8] sm:$0xff]
        %v306 = vld [vmem:[#allocation5 + $0x2d0] sm:$0xff]
        %v307 = vld [vmem:[#allocation5 + $0x2d8] sm:$0xff]
        %v308 = vld [vmem:[#allocation5 + $0x2e0] sm:$0xff]
        %v309 = vld [vmem:[#allocation5 + $0x2e8] sm:$0xff]
        %v310 = vld [vmem:[#allocation5 + $0x2f0] sm:$0xff]
        %v311 = vld [vmem:[#allocation5 + $0x2f8] sm:$0xff]
        %v312 = vld [vmem:[#allocation5 + $0x300] sm:$0xff]
        %v313 = vld [vmem:[#allocation5 + $0x308] sm:$0xff]
        %v314 = vld [vmem:[#allocation5 + $0x310] sm:$0xff]
        %v315 = vld [vmem:[#allocation5 + $0x318] sm:$0xff]
        %v316 = vld [vmem:[#allocation5 + $0x320] sm:$0xff]
        %v317 = vld [vmem:[#allocation5 + $0x328] sm:$0xff]
        %v318 = vld [vmem:[#allocation5 + $0x330] sm:$0xff]
        %v319 = vld [vmem:[#allocation5 + $0x338] sm:$0xff]
        %v320 = vld [vmem:[#allocation5 + $0x340] sm:$0xff]
        %v321 = vld [vmem:[#allocation5 + $0x348] sm:$0xff]
        %v322 = vld [vmem:[#allocation5 + $0x350] sm:$0xff]
        %v323 = vld [vmem:[#allocation5 + $0x358] sm:$0xff]
        %v324 = vld [vmem:[#allocation5 + $0x360] sm:$0xff]
        %v325 = vld [vmem:[#allocation5 + $0x368] sm:$0xff]
        %v326 = vld [vmem:[#allocation5 + $0x370] sm:$0xff]
        %v327 = vld [vmem:[#allocation5 + $0x378] sm:$0xff]
        %v328 = vld [vmem:[#allocation5 + $0x380] sm:$0xff]
        %v329 = vld [vmem:[#allocation5 + $0x388] sm:$0xff]
        %v330 = vld [vmem:[#allocation5 + $0x390] sm:$0xff]
        %v331 = vld [vmem:[#allocation5 + $0x398] sm:$0xff]
        %v332 = vld [vmem:[#allocation5 + $0x3a0] sm:$0xff]
        %v333 = vld [vmem:[#allocation5 + $0x3a8] sm:$0xff]
        %v334 = vld [vmem:[#allocation5 + $0x3b0] sm:$0xff]
        %v335 = vld [vmem:[#allocation5 + $0x3b8] sm:$0xff]
        %v336 = vld [vmem:[#allocation5 + $0x3c0] sm:$0xff]
        %v337 = vld [vmem:[#allocation5 + $0x3c8] sm:$0xff]
        %v338 = vld [vmem:[#allocation5 + $0x3d0] sm:$0xff]
        %v339 = vld [vmem:[#allocation5 + $0x3d8] sm:$0xff]
        %v340 = vld [vmem:[#allocation5 + $0x3e0] sm:$0xff]
        %v341 = vld [vmem:[#allocation5 + $0x3e8] sm:$0xff]
        %v342 = vld [vmem:[#allocation5 + $0x3f0] sm:$0xff]
        %v343 = vld [vmem:[#allocation5 + $0x3f8] sm:$0xff]
        %v344 = vld [vmem:[#allocation5 + $0x400] sm:$0xff]
        %v345 = vld [vmem:[#allocation5 + $0x408] sm:$0xff]
        %v346 = vld [vmem:[#allocation5 + $0x410] sm:$0xff]
        %v347 = vld [vmem:[#allocation5 + $0x418] sm:$0xff]
        %v348 = vld [vmem:[#allocation5 + $0x420] sm:$0xff]
        %v349 = vld [vmem:[#allocation5 + $0x428] sm:$0xff]
        %v350 = vld [vmem:[#allocation5 + $0x430] sm:$0xff]
        %v351 = vld [vmem:[#allocation5 + $0x438] sm:$0xff]
        %v352 = vld [vmem:[#allocation5 + $0x440] sm:$0xff]
        %v353 = vld [vmem:[#allocation5 + $0x448] sm:$0xff]
        %v354 = vld [vmem:[#allocation5 + $0x450] sm:$0xff]
        %v355 = vld [vmem:[#allocation5 + $0x458] sm:$0xff]
        %v356 = vld [vmem:[#allocation5 + $0x460] sm:$0xff]
        %v357 = vld [vmem:[#allocation5 + $0x468] sm:$0xff]
        %v358 = vld [vmem:[#allocation5 + $0x470] sm:$0xff]
        %v359 = vld [vmem:[#allocation5 + $0x478] sm:$0xff]
        %v360 = vld [vmem:[#allocation5 + $0x480] sm:$0xff]
        %v361 = vld [vmem:[#allocation5 + $0x488] sm:$0xff]
        %v362 = vld [vmem:[#allocation5 + $0x490] sm:$0xff]
        %v363 = vld [vmem:[#allocation5 + $0x498] sm:$0xff]
        %v364 = vld [vmem:[#allocation5 + $0x4a0] sm:$0xff]
        %v365 = vld [vmem:[#allocation5 + $0x4a8] sm:$0xff]
        %v366 = vld [vmem:[#allocation5 + $0x4b0] sm:$0xff]
        %v367 = vld [vmem:[#allocation5 + $0x4b8] sm:$0xff]
        %v368 = vld [vmem:[#allocation5 + $0x4c0] sm:$0xff]
        %v369 = vld [vmem:[#allocation5 + $0x4c8] sm:$0xff]
        %v370 = vld [vmem:[#allocation5 + $0x4d0] sm:$0xff]
        %v371 = vld [vmem:[#allocation5 + $0x4d8] sm:$0xff]
        %v372 = vld [vmem:[#allocation5 + $0x4e0] sm:$0xff]
        %v373 = vld [vmem:[#allocation5 + $0x4e8] sm:$0xff]
        %v374 = vld [vmem:[#allocation5 + $0x4f0] sm:$0xff]
        %v375 = vld [vmem:[#allocation5 + $0x4f8] sm:$0xff]
        %v376 = vld [vmem:[#allocation5 + $0x500] sm:$0xff]
        %v377 = vld [vmem:[#allocation5 + $0x508] sm:$0xff]
        %v378 = vld [vmem:[#allocation5 + $0x510] sm:$0xff]
        %v379 = vld [vmem:[#allocation5 + $0x518] sm:$0xff]
        %v380 = vld [vmem:[#allocation5 + $0x520] sm:$0xff]
        %v381 = vld [vmem:[#allocation5 + $0x528] sm:$0xff]
        %v382 = vld [vmem:[#allocation5 + $0x530] sm:$0xff]
        %v383 = vld [vmem:[#allocation5 + $0x538] sm:$0xff]
        %v384 = vld [vmem:[#allocation5 + $0x540] sm:$0xff]
        %v385 = vld [vmem:[#allocation5 + $0x548] sm:$0xff]
        %v386 = vld [vmem:[#allocation5 + $0x550] sm:$0xff]
        %v387 = vld [vmem:[#allocation5 + $0x558] sm:$0xff]
        %v388 = vld [vmem:[#allocation5 + $0x560] sm:$0xff]
        %v389 = vld [vmem:[#allocation5 + $0x568] sm:$0xff]
        %v390 = vld [vmem:[#allocation5 + $0x570] sm:$0xff]
        %v391 = vld [vmem:[#allocation5 + $0x578] sm:$0xff]
        %v392 = vld [vmem:[#allocation5 + $0x580] sm:$0xff]
        %v393 = vld [vmem:[#allocation5 + $0x588] sm:$0xff]
        %v394 = vld [vmem:[#allocation5 + $0x590] sm:$0xff]
        %v395 = vld [vmem:[#allocation5 + $0x598] sm:$0xff]
        %v396 = vld [vmem:[#allocation5 + $0x5a0] sm:$0xff]
        %v397 = vld [vmem:[#allocation5 + $0x5a8] sm:$0xff]
        %v398 = vld [vmem:[#allocation5 + $0x5b0] sm:$0xff]
        %v399 = vld [vmem:[#allocation5 + $0x5b8] sm:$0xff]
        %v400 = vld [vmem:[#allocation5 + $0x5c0] sm:$0xff]
        %v401 = vld [vmem:[#allocation5 + $0x5c8] sm:$0xff]
        %v402 = vld [vmem:[#allocation5 + $0x5d0] sm:$0xff]
        %v403 = vld [vmem:[#allocation5 + $0x5d8] sm:$0xff]
        %v404 = vld [vmem:[#allocation5 + $0x5e0] sm:$0xff]
        %v405 = vld [vmem:[#allocation5 + $0x5e8] sm:$0xff]
        %v406 = vld [vmem:[#allocation5 + $0x5f0] sm:$0xff]
        %v407 = vld [vmem:[#allocation5 + $0x5f8] sm:$0xff]
        %v408 = vld [vmem:[#allocation5 + $0x600] sm:$0xff]
        %v409 = vld [vmem:[#allocation5 + $0x608] sm:$0xff]
        %v410 = vld [vmem:[#allocation5 + $0x610] sm:$0xff]
        %v411 = vld [vmem:[#allocation5 + $0x618] sm:$0xff]
        %v412 = vld [vmem:[#allocation5 + $0x620] sm:$0xff]
        %v413 = vld [vmem:[#allocation5 + $0x628] sm:$0xff]
        %v414 = vld [vmem:[#allocation5 + $0x630] sm:$0xff]
        %v415 = vld [vmem:[#allocation5 + $0x638] sm:$0xff]
        %v416 = vld [vmem:[#allocation5 + $0x640] sm:$0xff]
        %v417 = vld [vmem:[#allocation5 + $0x648] sm:$0xff]
        %v418 = vld [vmem:[#allocation5 + $0x650] sm:$0xff]
        %v419 = vld [vmem:[#allocation5 + $0x658] sm:$0xff]
        %v420 = vld [vmem:[#allocation5 + $0x660] sm:$0xff]
        %v421 = vld [vmem:[#allocation5 + $0x668] sm:$0xff]
        %v422 = vld [vmem:[#allocation5 + $0x670] sm:$0xff]
        %v423 = vld [vmem:[#allocation5 + $0x678] sm:$0xff]
        %v424 = vld [vmem:[#allocation5 + $0x680] sm:$0xff]
        %v425 = vld [vmem:[#allocation5 + $0x688] sm:$0xff]
        %v426 = vld [vmem:[#allocation5 + $0x690] sm:$0xff]
        %v427 = vld [vmem:[#allocation5 + $0x698] sm:$0xff]
        %v428 = vld [vmem:[#allocation5 + $0x6a0] sm:$0xff]
        %v429 = vld [vmem:[#allocation5 + $0x6a8] sm:$0xff]
        %v430 = vld [vmem:[#allocation5 + $0x6b0] sm:$0xff]
        %v431 = vld [vmem:[#allocation5 + $0x6b8] sm:$0xff]
        %v432 = vld [vmem:[#allocation5 + $0x6c0] sm:$0xff]
        %v433 = vld [vmem:[#allocation5 + $0x6c8] sm:$0xff]
        %v434 = vld [vmem:[#allocation5 + $0x6d0] sm:$0xff]
        %v435 = vld [vmem:[#allocation5 + $0x6d8] sm:$0xff]
        %v436 = vld [vmem:[#allocation5 + $0x6e0] sm:$0xff]
        %v437 = vld [vmem:[#allocation5 + $0x6e8] sm:$0xff]
        %v438 = vld [vmem:[#allocation5 + $0x6f0] sm:$0xff]
        %v439 = vld [vmem:[#allocation5 + $0x6f8] sm:$0xff]
        %v440 = vld [vmem:[#allocation5 + $0x700] sm:$0xff]
        %v441 = vld [vmem:[#allocation5 + $0x708] sm:$0xff]
        %v442 = vld [vmem:[#allocation5 + $0x710] sm:$0xff]
        %v443 = vld [vmem:[#allocation5 + $0x718] sm:$0xff]
        %v444 = vld [vmem:[#allocation5 + $0x720] sm:$0xff]
        %v445 = vld [vmem:[#allocation5 + $0x728] sm:$0xff]
        %v446 = vld [vmem:[#allocation5 + $0x730] sm:$0xff]
        %v447 = vld [vmem:[#allocation5 + $0x738] sm:$0xff]
        %v448 = vld [vmem:[#allocation5 + $0x740] sm:$0xff]
        %v449 = vld [vmem:[#allocation5 + $0x748] sm:$0xff]
        %v450 = vld [vmem:[#allocation5 + $0x750] sm:$0xff]
        %v451 = vld [vmem:[#allocation5 + $0x758] sm:$0xff]
        %v452 = vld [vmem:[#allocation5 + $0x760] sm:$0xff]
        %v453 = vld [vmem:[#allocation5 + $0x768] sm:$0xff]
        %v454 = vld [vmem:[#allocation5 + $0x770] sm:$0xff]
        %v455 = vld [vmem:[#allocation5 + $0x778] sm:$0xff]
        %v456 = vld [vmem:[#allocation5 + $0x780] sm:$0xff]
        %v457 = vld [vmem:[#allocation5 + $0x788] sm:$0xff]
        %v458 = vld [vmem:[#allocation5 + $0x790] sm:$0xff]
        %v459 = vld [vmem:[#allocation5 + $0x798] sm:$0xff]
        %v460 = vld [vmem:[#allocation5 + $0x7a0] sm:$0xff]
        %v461 = vld [vmem:[#allocation5 + $0x7a8] sm:$0xff]
        %v462 = vld [vmem:[#allocation5 + $0x7b0] sm:$0xff]
        %v463 = vld [vmem:[#allocation5 + $0x7b8] sm:$0xff]
        %v464 = vld [vmem:[#allocation5 + $0x7c0] sm:$0xff]
        %v465 = vld [vmem:[#allocation5 + $0x7c8] sm:$0xff]
        %v466 = vld [vmem:[#allocation5 + $0x7d0] sm:$0xff]
        %v467 = vld [vmem:[#allocation5 + $0x7d8] sm:$0xff]
        %v468 = vld [vmem:[#allocation5 + $0x7e0] sm:$0xff]
        %v469 = vld [vmem:[#allocation5 + $0x7e8] sm:$0xff]
        %v470 = vld [vmem:[#allocation5 + $0x7f0] sm:$0xff]
        %v471 = vld [vmem:[#allocation5 + $0x7f8] sm:$0xff]
        %v472 = vld [vmem:[#allocation5 + $0x800] sm:$0xff]
        %v473 = vld [vmem:[#allocation5 + $0x808] sm:$0xff]
        %v474 = vld [vmem:[#allocation5 + $0x810] sm:$0xff]
        %v475 = vld [vmem:[#allocation5 + $0x818] sm:$0xff]
        %v476 = vld [vmem:[#allocation5 + $0x820] sm:$0xff]
        %v477 = vld [vmem:[#allocation5 + $0x828] sm:$0xff]
        %v478 = vld [vmem:[#allocation5 + $0x830] sm:$0xff]
        %v479 = vld [vmem:[#allocation5 + $0x838] sm:$0xff]
        %v480 = vld [vmem:[#allocation5 + $0x840] sm:$0xff]
        %v481 = vld [vmem:[#allocation5 + $0x848] sm:$0xff]
        %v482 = vld [vmem:[#allocation5 + $0x850] sm:$0xff]
        %v483 = vld [vmem:[#allocation5 + $0x858] sm:$0xff]
        %v484 = vld [vmem:[#allocation5 + $0x860] sm:$0xff]
        %v485 = vld [vmem:[#allocation5 + $0x868] sm:$0xff]
        %v486 = vld [vmem:[#allocation5 + $0x870] sm:$0xff]
        %v487 = vld [vmem:[#allocation5 + $0x878] sm:$0xff]
        %v488 = vld [vmem:[#allocation5 + $0x880] sm:$0xff]
        %v489 = vld [vmem:[#allocation5 + $0x888] sm:$0xff]
        %v490 = vld [vmem:[#allocation5 + $0x890] sm:$0xff]
        %v491 = vld [vmem:[#allocation5 + $0x898] sm:$0xff]
        %v492 = vld [vmem:[#allocation5 + $0x8a0] sm:$0xff]
        %v493 = vld [vmem:[#allocation5 + $0x8a8] sm:$0xff]
        %v494 = vld [vmem:[#allocation5 + $0x8b0] sm:$0xff]
        %v495 = vld [vmem:[#allocation5 + $0x8b8] sm:$0xff]
        %v496 = vld [vmem:[#allocation5 + $0x8c0] sm:$0xff]
        %v497 = vld [vmem:[#allocation5 + $0x8c8] sm:$0xff]
        %v498 = vld [vmem:[#allocation5 + $0x8d0] sm:$0xff]
        %v499 = vld [vmem:[#allocation5 + $0x8d8] sm:$0xff]
        %v500 = vld [vmem:[#allocation5 + $0x8e0] sm:$0xff]
        %v501 = vld [vmem:[#allocation5 + $0x8e8] sm:$0xff]
        %v502 = vld [vmem:[#allocation5 + $0x8f0] sm:$0xff]
        %v503 = vld [vmem:[#allocation5 + $0x8f8] sm:$0xff]
        %v504 = vld [vmem:[#allocation5 + $0x900] sm:$0xff]
        %v505 = vld [vmem:[#allocation5 + $0x908] sm:$0xff]
        %v506 = vld [vmem:[#allocation5 + $0x910] sm:$0xff]
        %v507 = vld [vmem:[#allocation5 + $0x918] sm:$0xff]
        %v508 = vld [vmem:[#allocation5 + $0x920] sm:$0xff]
        %v509 = vld [vmem:[#allocation5 + $0x928] sm:$0xff]
        %v510 = vld [vmem:[#allocation5 + $0x930] sm:$0xff]
        %v511 = vld [vmem:[#allocation5 + $0x938] sm:$0xff]
        %v512 = vld [vmem:[#allocation5 + $0x940] sm:$0xff]
        %v513 = vld [vmem:[#allocation5 + $0x948] sm:$0xff]
        %v514 = vld [vmem:[#allocation5 + $0x950] sm:$0xff]
        %v515 = vld [vmem:[#allocation5 + $0x958] sm:$0xff]
        %v516 = vld [vmem:[#allocation5 + $0x960] sm:$0xff]
        %v517 = vld [vmem:[#allocation5 + $0x968] sm:$0xff]
        %v518 = vld [vmem:[#allocation5 + $0x970] sm:$0xff]
        %v519 = vld [vmem:[#allocation5 + $0x978] sm:$0xff]
        %v520 = vld [vmem:[#allocation5 + $0x980] sm:$0xff]
        %v521 = vld [vmem:[#allocation5 + $0x988] sm:$0xff]
        %v522 = vld [vmem:[#allocation5 + $0x990] sm:$0xff]
        %v523 = vld [vmem:[#allocation5 + $0x998] sm:$0xff]
        %v524 = vld [vmem:[#allocation5 + $0x9a0] sm:$0xff]
        %v525 = vld [vmem:[#allocation5 + $0x9a8] sm:$0xff]
        %v526 = vld [vmem:[#allocation5 + $0x9b0] sm:$0xff]
        %v527 = vld [vmem:[#allocation5 + $0x9b8] sm:$0xff]
        %v528 = vld [vmem:[#allocation5 + $0x9c0] sm:$0xff]
        %v529 = vld [vmem:[#allocation5 + $0x9c8] sm:$0xff]
        %v530 = vld [vmem:[#allocation5 + $0x9d0] sm:$0xff]
        %v531 = vld [vmem:[#allocation5 + $0x9d8] sm:$0xff]
        %v532 = vld [vmem:[#allocation5 + $0x9e0] sm:$0xff]
        %v533 = vld [vmem:[#allocation5 + $0x9e8] sm:$0xff]
        %v534 = vld [vmem:[#allocation5 + $0x9f0] sm:$0xff]
        %v535 = vld [vmem:[#allocation5 + $0x9f8] sm:$0xff]
        %v536 = vld [vmem:[#allocation5 + $0xa00] sm:$0xff]
        %v537 = vld [vmem:[#allocation5 + $0xa08] sm:$0xff]
        %v538 = vld [vmem:[#allocation5 + $0xa10] sm:$0xff]
        %v539 = vld [vmem:[#allocation5 + $0xa18] sm:$0xff]
        %v540 = vld [vmem:[#allocation5 + $0xa20] sm:$0xff]
        %v541 = vld [vmem:[#allocation5 + $0xa28] sm:$0xff]
        %v542 = vld [vmem:[#allocation5 + $0xa30] sm:$0xff]
        %v543 = vld [vmem:[#allocation5 + $0xa38] sm:$0xff]
        %v544 = vld [vmem:[#allocation5 + $0xa40] sm:$0xff]
        %v545 = vld [vmem:[#allocation5 + $0xa48] sm:$0xff]
        %v546 = vld [vmem:[#allocation5 + $0xa50] sm:$0xff]
        %v547 = vld [vmem:[#allocation5 + $0xa58] sm:$0xff]
        %v548 = vld [vmem:[#allocation5 + $0xa60] sm:$0xff]
        %v549 = vld [vmem:[#allocation5 + $0xa68] sm:$0xff]
        %v550 = vld [vmem:[#allocation5 + $0xa70] sm:$0xff]
        %v551 = vld [vmem:[#allocation5 + $0xa78] sm:$0xff]
        %v552 = vld [vmem:[#allocation5 + $0xa80] sm:$0xff]
        %v553 = vld [vmem:[#allocation5 + $0xa88] sm:$0xff]
        %v554 = vld [vmem:[#allocation5 + $0xa90] sm:$0xff]
        %v555 = vld [vmem:[#allocation5 + $0xa98] sm:$0xff]
        %v556 = vld [vmem:[#allocation5 + $0xaa0] sm:$0xff]
        %v557 = vld [vmem:[#allocation5 + $0xaa8] sm:$0xff]
        %v558 = vld [vmem:[#allocation5 + $0xab0] sm:$0xff]
        %v559 = vld [vmem:[#allocation5 + $0xab8] sm:$0xff]
        %v560 = vld [vmem:[#allocation5 + $0xac0] sm:$0xff]
        %v561 = vld [vmem:[#allocation5 + $0xac8] sm:$0xff]
        %v562 = vld [vmem:[#allocation5 + $0xad0] sm:$0xff]
        %v563 = vld [vmem:[#allocation5 + $0xad8] sm:$0xff]
        %v564 = vld [vmem:[#allocation5 + $0xae0] sm:$0xff]
        %v565 = vld [vmem:[#allocation5 + $0xae8] sm:$0xff]
        %v566 = vld [vmem:[#allocation5 + $0xaf0] sm:$0xff]
        %v567 = vld [vmem:[#allocation5 + $0xaf8] sm:$0xff]
        %v568 = vld [vmem:[#allocation5 + $0xb00] sm:$0xff]
        %v569 = vld [vmem:[#allocation5 + $0xb08] sm:$0xff]
        %v570 = vld [vmem:[#allocation5 + $0xb10] sm:$0xff]
        %v571 = vld [vmem:[#allocation5 + $0xb18] sm:$0xff]
        %v572 = vld [vmem:[#allocation5 + $0xb20] sm:$0xff]
        %v573 = vld [vmem:[#allocation5 + $0xb28] sm:$0xff]
        %v574 = vld [vmem:[#allocation5 + $0xb30] sm:$0xff]
        %v575 = vld [vmem:[#allocation5 + $0xb38] sm:$0xff]
        %v576 = vld [vmem:[#allocation5 + $0xb40] sm:$0xff]
        %v577 = vld [vmem:[#allocation5 + $0xb48] sm:$0xff]
        %v578 = vld [vmem:[#allocation5 + $0xb50] sm:$0xff]
        %v579 = vld [vmem:[#allocation5 + $0xb58] sm:$0xff]
        %v580 = vld [vmem:[#allocation5 + $0xb60] sm:$0xff]
        %v581 = vld [vmem:[#allocation5 + $0xb68] sm:$0xff]
        %v582 = vld [vmem:[#allocation5 + $0xb70] sm:$0xff]
        %v583 = vld [vmem:[#allocation5 + $0xb78] sm:$0xff]
        %v584 = vld [vmem:[#allocation5 + $0xb80] sm:$0xff]
        %v585 = vld [vmem:[#allocation5 + $0xb88] sm:$0xff]
        %v586 = vld [vmem:[#allocation5 + $0xb90] sm:$0xff]
        %v587 = vld [vmem:[#allocation5 + $0xb98] sm:$0xff]
        %v588 = vld [vmem:[#allocation5 + $0xba0] sm:$0xff]
        %v589 = vld [vmem:[#allocation5 + $0xba8] sm:$0xff]
        %v590 = vld [vmem:[#allocation5 + $0xbb0] sm:$0xff]
        %v591 = vld [vmem:[#allocation5 + $0xbb8] sm:$0xff]
        %v592 = vld [vmem:[#allocation5 + $0xbc0] sm:$0xff]
        %v593 = vld [vmem:[#allocation5 + $0xbc8] sm:$0xff]
        %v594 = vld [vmem:[#allocation5 + $0xbd0] sm:$0xff]
        %v595 = vld [vmem:[#allocation5 + $0xbd8] sm:$0xff]
        %v596 = vld [vmem:[#allocation5 + $0xbe0] sm:$0xff]
        %v597 = vld [vmem:[#allocation5 + $0xbe8] sm:$0xff]
        %v598 = vld [vmem:[#allocation5 + $0xbf0] sm:$0xff]
        %v599 = vld [vmem:[#allocation5 + $0xbf8] sm:$0xff]
        %v600 = vld [vmem:[#allocation7] sm:$0xff]
        %v601 = vld [vmem:[#allocation7 + $0x8] sm:$0xf]
        %v604 = vlaneseq
        %v605 = vshrl.u32 %v604, 7
        %v606 = vsub.s32 0, %v605
        %v607 = vrot.slane %v600, %v606
        %v608 = vlaneseq
        %v609 = vshrl.u32 %v608, 7
        %v610 = vsub.s32 1, %v609
        %v611 = vrot.slane %v600, %v610
        %v612 = vlaneseq
        %v613 = vshrl.u32 %v612, 7
        %v614 = vsub.s32 2, %v613
        %v615 = vrot.slane %v600, %v614
        %v616 = vlaneseq
        %v617 = vshrl.u32 %v616, 7
        %v618 = vsub.s32 3, %v617
        %v619 = vrot.slane %v600, %v618
        %v620 = vlaneseq
        %v621 = vshrl.u32 %v620, 7
        %v622 = vsub.s32 4, %v621
        %v623 = vrot.slane %v600, %v622
        %v624 = vlaneseq
        %v625 = vshrl.u32 %v624, 7
        %v626 = vsub.s32 5, %v625
        %v627 = vrot.slane %v600, %v626
        %v628 = vlaneseq
        %v629 = vshrl.u32 %v628, 7
        %v630 = vsub.s32 6, %v629
        %v631 = vrot.slane %v600, %v630
        %v632 = vlaneseq
        %v633 = vshrl.u32 %v632, 7
        %v634 = vsub.s32 7, %v633
        %v635 = vrot.slane %v600, %v634
        %v636 = vlaneseq
        %v637 = vshrl.u32 %v636, 7
        %v638 = vsub.s32 0, %v637
        %v639 = vrot.slane %v601, %v638
        %v640 = vlaneseq
        %v641 = vshrl.u32 %v640, 7
        %v642 = vsub.s32 1, %v641
        %v643 = vrot.slane %v601, %v642
        %v644 = vlaneseq
        %v645 = vshrl.u32 %v644, 7
        %v646 = vsub.s32 2, %v645
        %v647 = vrot.slane %v601, %v646
        %v648 = vlaneseq
        %v649 = vshrl.u32 %v648, 7
        %v650 = vsub.s32 3, %v649
        %v651 = vrot.slane %v601, %v650
        %v666 = vunpack.c.l.b16 %v214
        %v667 = vunpack.c.h.b16 %v214
        %v668 = vunpack.c.l.b16 %v215
        %v669 = vunpack.c.h.b16 %v215
        %v670 = vpack.c.b16 %v666, %v666
        %v671 = vpack.c.b16 %v667, %v667
        %v672 = vpack.c.b16 %v668, %v668
        %v673 = vpack.c.b16 %v669, %v669
        %v1062 = vunpack.c.l.b16 %v216
        %v1063 = vunpack.c.h.b16 %v216
        %v1064 = vunpack.c.l.b16 %v217
        %v1065 = vunpack.c.h.b16 %v217
        %v1066 = vunpack.c.l.b16 %v218
        %v1067 = vunpack.c.h.b16 %v218
        %v1068 = vunpack.c.l.b16 %v219
        %v1069 = vunpack.c.h.b16 %v219
        %v1070 = vunpack.c.l.b16 %v220
        %v1071 = vunpack.c.h.b16 %v220
        %v1072 = vunpack.c.l.b16 %v221
        %v1073 = vunpack.c.h.b16 %v221
        %v1074 = vunpack.c.l.b16 %v222
        %v1075 = vunpack.c.h.b16 %v222
        %v1076 = vunpack.c.l.b16 %v223
        %v1077 = vunpack.c.h.b16 %v223
        %v1078 = vunpack.c.l.b16 %v224
        %v1079 = vunpack.c.h.b16 %v224
        %v1080 = vunpack.c.l.b16 %v225
        %v1081 = vunpack.c.h.b16 %v225
        %v1082 = vunpack.c.l.b16 %v226
        %v1083 = vunpack.c.h.b16 %v226
        %v1084 = vunpack.c.l.b16 %v227
        %v1085 = vunpack.c.h.b16 %v227
        %v1086 = vunpack.c.l.b16 %v228
        %v1087 = vunpack.c.h.b16 %v228
        %v1088 = vunpack.c.l.b16 %v229
        %v1089 = vunpack.c.h.b16 %v229
        %v1090 = vunpack.c.l.b16 %v230
        %v1091 = vunpack.c.h.b16 %v230
        %v1092 = vunpack.c.l.b16 %v231
        %v1093 = vunpack.c.h.b16 %v231
        %v1094 = vunpack.c.l.b16 %v232
        %v1095 = vunpack.c.h.b16 %v232
        %v1096 = vunpack.c.l.b16 %v233
        %v1097 = vunpack.c.h.b16 %v233
        %v1098 = vunpack.c.l.b16 %v234
        %v1099 = vunpack.c.h.b16 %v234
        %v1100 = vunpack.c.l.b16 %v235
        %v1101 = vunpack.c.h.b16 %v235
        %v1102 = vunpack.c.l.b16 %v236
        %v1103 = vunpack.c.h.b16 %v236
        %v1104 = vunpack.c.l.b16 %v237
        %v1105 = vunpack.c.h.b16 %v237
        %v1106 = vunpack.c.l.b16 %v238
        %v1107 = vunpack.c.h.b16 %v238
        %v1108 = vunpack.c.l.b16 %v239
        %v1109 = vunpack.c.h.b16 %v239
        %v1110 = vunpack.c.l.b16 %v240
        %v1111 = vunpack.c.h.b16 %v240
        %v1112 = vunpack.c.l.b16 %v241
        %v1113 = vunpack.c.h.b16 %v241
        %v1114 = vunpack.c.l.b16 %v242
        %v1115 = vunpack.c.h.b16 %v242
        %v1116 = vunpack.c.l.b16 %v243
        %v1117 = vunpack.c.h.b16 %v243
        %v1118 = vunpack.c.l.b16 %v244
        %v1119 = vunpack.c.h.b16 %v244
        %v1120 = vunpack.c.l.b16 %v245
        %v1121 = vunpack.c.h.b16 %v245
        %v1122 = vunpack.c.l.b16 %v246
        %v1123 = vunpack.c.h.b16 %v246
        %v1124 = vunpack.c.l.b16 %v247
        %v1125 = vunpack.c.h.b16 %v247
        %v1126 = vunpack.c.l.b16 %v248
        %v1127 = vunpack.c.h.b16 %v248
        %v1128 = vunpack.c.l.b16 %v249
        %v1129 = vunpack.c.h.b16 %v249
        %v1130 = vunpack.c.l.b16 %v250
        %v1131 = vunpack.c.h.b16 %v250
        %v1132 = vunpack.c.l.b16 %v251
        %v1133 = vunpack.c.h.b16 %v251
        %v1134 = vunpack.c.l.b16 %v252
        %v1135 = vunpack.c.h.b16 %v252
        %v1136 = vunpack.c.l.b16 %v253
        %v1137 = vunpack.c.h.b16 %v253
        %v1138 = vunpack.c.l.b16 %v254
        %v1139 = vunpack.c.h.b16 %v254
        %v1140 = vunpack.c.l.b16 %v255
        %v1141 = vunpack.c.h.b16 %v255
        %v1142 = vunpack.c.l.b16 %v256
        %v1143 = vunpack.c.h.b16 %v256
        %v1144 = vunpack.c.l.b16 %v257
        %v1145 = vunpack.c.h.b16 %v257
        %v1146 = vunpack.c.l.b16 %v258
        %v1147 = vunpack.c.h.b16 %v258
        %v1148 = vunpack.c.l.b16 %v259
        %v1149 = vunpack.c.h.b16 %v259
        %v1150 = vunpack.c.l.b16 %v260
        %v1151 = vunpack.c.h.b16 %v260
        %v1152 = vunpack.c.l.b16 %v261
        %v1153 = vunpack.c.h.b16 %v261
        %v1154 = vunpack.c.l.b16 %v262
        %v1155 = vunpack.c.h.b16 %v262
        %v1156 = vunpack.c.l.b16 %v263
        %v1157 = vunpack.c.h.b16 %v263
        %v1158 = vunpack.c.l.b16 %v264
        %v1159 = vunpack.c.h.b16 %v264
        %v1160 = vunpack.c.l.b16 %v265
        %v1161 = vunpack.c.h.b16 %v265
        %v1162 = vunpack.c.l.b16 %v266
        %v1163 = vunpack.c.h.b16 %v266
        %v1164 = vunpack.c.l.b16 %v267
        %v1165 = vunpack.c.h.b16 %v267
        %v1166 = vunpack.c.l.b16 %v268
        %v1167 = vunpack.c.h.b16 %v268
        %v1168 = vunpack.c.l.b16 %v269
        %v1169 = vunpack.c.h.b16 %v269
        %v1170 = vunpack.c.l.b16 %v270
        %v1171 = vunpack.c.h.b16 %v270
        %v1172 = vunpack.c.l.b16 %v271
        %v1173 = vunpack.c.h.b16 %v271
        %v1174 = vunpack.c.l.b16 %v272
        %v1175 = vunpack.c.h.b16 %v272
        %v1176 = vunpack.c.l.b16 %v273
        %v1177 = vunpack.c.h.b16 %v273
        %v1178 = vunpack.c.l.b16 %v274
        %v1179 = vunpack.c.h.b16 %v274
        %v1180 = vunpack.c.l.b16 %v275
        %v1181 = vunpack.c.h.b16 %v275
        %v1182 = vunpack.c.l.b16 %v276
        %v1183 = vunpack.c.h.b16 %v276
        %v1184 = vunpack.c.l.b16 %v277
        %v1185 = vunpack.c.h.b16 %v277
        %v1186 = vunpack.c.l.b16 %v278
        %v1187 = vunpack.c.h.b16 %v278
        %v1188 = vunpack.c.l.b16 %v279
        %v1189 = vunpack.c.h.b16 %v279
        %v1190 = vunpack.c.l.b16 %v280
        %v1191 = vunpack.c.h.b16 %v280
        %v1192 = vunpack.c.l.b16 %v281
        %v1193 = vunpack.c.h.b16 %v281
        %v1194 = vunpack.c.l.b16 %v282
        %v1195 = vunpack.c.h.b16 %v282
        %v1196 = vunpack.c.l.b16 %v283
        %v1197 = vunpack.c.h.b16 %v283
        %v1198 = vunpack.c.l.b16 %v284
        %v1199 = vunpack.c.h.b16 %v284
        %v1200 = vunpack.c.l.b16 %v285
        %v1201 = vunpack.c.h.b16 %v285
        %v1202 = vunpack.c.l.b16 %v286
        %v1203 = vunpack.c.h.b16 %v286
        %v1204 = vunpack.c.l.b16 %v287
        %v1205 = vunpack.c.h.b16 %v287
        %v1206 = vunpack.c.l.b16 %v288
        %v1207 = vunpack.c.h.b16 %v288
        %v1208 = vunpack.c.l.b16 %v289
        %v1209 = vunpack.c.h.b16 %v289
        %v1210 = vunpack.c.l.b16 %v290
        %v1211 = vunpack.c.h.b16 %v290
        %v1212 = vunpack.c.l.b16 %v291
        %v1213 = vunpack.c.h.b16 %v291
        %v1214 = vunpack.c.l.b16 %v292
        %v1215 = vunpack.c.h.b16 %v292
        %v1216 = vunpack.c.l.b16 %v293
        %v1217 = vunpack.c.h.b16 %v293
        %v1218 = vunpack.c.l.b16 %v294
        %v1219 = vunpack.c.h.b16 %v294
        %v1220 = vunpack.c.l.b16 %v295
        %v1221 = vunpack.c.h.b16 %v295
        %v1222 = vunpack.c.l.b16 %v296
        %v1223 = vunpack.c.h.b16 %v296
        %v1224 = vunpack.c.l.b16 %v297
        %v1225 = vunpack.c.h.b16 %v297
        %v1226 = vunpack.c.l.b16 %v298
        %v1227 = vunpack.c.h.b16 %v298
        %v1228 = vunpack.c.l.b16 %v299
        %v1229 = vunpack.c.h.b16 %v299
        %v1230 = vunpack.c.l.b16 %v300
        %v1231 = vunpack.c.h.b16 %v300
        %v1232 = vunpack.c.l.b16 %v301
        %v1233 = vunpack.c.h.b16 %v301
        %v1234 = vunpack.c.l.b16 %v302
        %v1235 = vunpack.c.h.b16 %v302
        %v1236 = vunpack.c.l.b16 %v303
        %v1237 = vunpack.c.h.b16 %v303
        %v1238 = vunpack.c.l.b16 %v304
        %v1239 = vunpack.c.h.b16 %v304
        %v1240 = vunpack.c.l.b16 %v305
        %v1241 = vunpack.c.h.b16 %v305
        %v1242 = vunpack.c.l.b16 %v306
        %v1243 = vunpack.c.h.b16 %v306
        %v1244 = vunpack.c.l.b16 %v307
        %v1245 = vunpack.c.h.b16 %v307
        %v1246 = vunpack.c.l.b16 %v308
        %v1247 = vunpack.c.h.b16 %v308
        %v1248 = vunpack.c.l.b16 %v309
        %v1249 = vunpack.c.h.b16 %v309
        %v1250 = vunpack.c.l.b16 %v310
        %v1251 = vunpack.c.h.b16 %v310
        %v1252 = vunpack.c.l.b16 %v311
        %v1253 = vunpack.c.h.b16 %v311
        %v1254 = vunpack.c.l.b16 %v312
        %v1255 = vunpack.c.h.b16 %v312
        %v1256 = vunpack.c.l.b16 %v313
        %v1257 = vunpack.c.h.b16 %v313
        %v1258 = vunpack.c.l.b16 %v314
        %v1259 = vunpack.c.h.b16 %v314
        %v1260 = vunpack.c.l.b16 %v315
        %v1261 = vunpack.c.h.b16 %v315
        %v1262 = vunpack.c.l.b16 %v316
        %v1263 = vunpack.c.h.b16 %v316
        %v1264 = vunpack.c.l.b16 %v317
        %v1265 = vunpack.c.h.b16 %v317
        %v1266 = vunpack.c.l.b16 %v318
        %v1267 = vunpack.c.h.b16 %v318
        %v1268 = vunpack.c.l.b16 %v319
        %v1269 = vunpack.c.h.b16 %v319
        %v1270 = vunpack.c.l.b16 %v320
        %v1271 = vunpack.c.h.b16 %v320
        %v1272 = vunpack.c.l.b16 %v321
        %v1273 = vunpack.c.h.b16 %v321
        %v1274 = vunpack.c.l.b16 %v322
        %v1275 = vunpack.c.h.b16 %v322
        %v1276 = vunpack.c.l.b16 %v323
        %v1277 = vunpack.c.h.b16 %v323
        %v1278 = vunpack.c.l.b16 %v324
        %v1279 = vunpack.c.h.b16 %v324
        %v1280 = vunpack.c.l.b16 %v325
        %v1281 = vunpack.c.h.b16 %v325
        %v1282 = vunpack.c.l.b16 %v326
        %v1283 = vunpack.c.h.b16 %v326
        %v1284 = vunpack.c.l.b16 %v327
        %v1285 = vunpack.c.h.b16 %v327
        %v1286 = vunpack.c.l.b16 %v328
        %v1287 = vunpack.c.h.b16 %v328
        %v1288 = vunpack.c.l.b16 %v329
        %v1289 = vunpack.c.h.b16 %v329
        %v1290 = vunpack.c.l.b16 %v330
        %v1291 = vunpack.c.h.b16 %v330
        %v1292 = vunpack.c.l.b16 %v331
        %v1293 = vunpack.c.h.b16 %v331
        %v1294 = vunpack.c.l.b16 %v332
        %v1295 = vunpack.c.h.b16 %v332
        %v1296 = vunpack.c.l.b16 %v333
        %v1297 = vunpack.c.h.b16 %v333
        %v1298 = vunpack.c.l.b16 %v334
        %v1299 = vunpack.c.h.b16 %v334
        %v1300 = vunpack.c.l.b16 %v335
        %v1301 = vunpack.c.h.b16 %v335
        %v1302 = vunpack.c.l.b16 %v336
        %v1303 = vunpack.c.h.b16 %v336
        %v1304 = vunpack.c.l.b16 %v337
        %v1305 = vunpack.c.h.b16 %v337
        %v1306 = vunpack.c.l.b16 %v338
        %v1307 = vunpack.c.h.b16 %v338
        %v1308 = vunpack.c.l.b16 %v339
        %v1309 = vunpack.c.h.b16 %v339
        %v1310 = vunpack.c.l.b16 %v340
        %v1311 = vunpack.c.h.b16 %v340
        %v1312 = vunpack.c.l.b16 %v341
        %v1313 = vunpack.c.h.b16 %v341
        %v1314 = vunpack.c.l.b16 %v342
        %v1315 = vunpack.c.h.b16 %v342
        %v1316 = vunpack.c.l.b16 %v343
        %v1317 = vunpack.c.h.b16 %v343
        %v1318 = vunpack.c.l.b16 %v344
        %v1319 = vunpack.c.h.b16 %v344
        %v1320 = vunpack.c.l.b16 %v345
        %v1321 = vunpack.c.h.b16 %v345
        %v1322 = vunpack.c.l.b16 %v346
        %v1323 = vunpack.c.h.b16 %v346
        %v1324 = vunpack.c.l.b16 %v347
        %v1325 = vunpack.c.h.b16 %v347
        %v1326 = vunpack.c.l.b16 %v348
        %v1327 = vunpack.c.h.b16 %v348
        %v1328 = vunpack.c.l.b16 %v349
        %v1329 = vunpack.c.h.b16 %v349
        %v1330 = vunpack.c.l.b16 %v350
        %v1331 = vunpack.c.h.b16 %v350
        %v1332 = vunpack.c.l.b16 %v351
        %v1333 = vunpack.c.h.b16 %v351
        %v1334 = vunpack.c.l.b16 %v352
        %v1335 = vunpack.c.h.b16 %v352
        %v1336 = vunpack.c.l.b16 %v353
        %v1337 = vunpack.c.h.b16 %v353
        %v1338 = vunpack.c.l.b16 %v354
        %v1339 = vunpack.c.h.b16 %v354
        %v1340 = vunpack.c.l.b16 %v355
        %v1341 = vunpack.c.h.b16 %v355
        %v1342 = vunpack.c.l.b16 %v356
        %v1343 = vunpack.c.h.b16 %v356
        %v1344 = vunpack.c.l.b16 %v357
        %v1345 = vunpack.c.h.b16 %v357
        %v1346 = vunpack.c.l.b16 %v358
        %v1347 = vunpack.c.h.b16 %v358
        %v1348 = vunpack.c.l.b16 %v359
        %v1349 = vunpack.c.h.b16 %v359
        %v1350 = vunpack.c.l.b16 %v360
        %v1351 = vunpack.c.h.b16 %v360
        %v1352 = vunpack.c.l.b16 %v361
        %v1353 = vunpack.c.h.b16 %v361
        %v1354 = vunpack.c.l.b16 %v362
        %v1355 = vunpack.c.h.b16 %v362
        %v1356 = vunpack.c.l.b16 %v363
        %v1357 = vunpack.c.h.b16 %v363
        %v1358 = vunpack.c.l.b16 %v364
        %v1359 = vunpack.c.h.b16 %v364
        %v1360 = vunpack.c.l.b16 %v365
        %v1361 = vunpack.c.h.b16 %v365
        %v1362 = vunpack.c.l.b16 %v366
        %v1363 = vunpack.c.h.b16 %v366
        %v1364 = vunpack.c.l.b16 %v367
        %v1365 = vunpack.c.h.b16 %v367
        %v1366 = vunpack.c.l.b16 %v368
        %v1367 = vunpack.c.h.b16 %v368
        %v1368 = vunpack.c.l.b16 %v369
        %v1369 = vunpack.c.h.b16 %v369
        %v1370 = vunpack.c.l.b16 %v370
        %v1371 = vunpack.c.h.b16 %v370
        %v1372 = vunpack.c.l.b16 %v371
        %v1373 = vunpack.c.h.b16 %v371
        %v1374 = vunpack.c.l.b16 %v372
        %v1375 = vunpack.c.h.b16 %v372
        %v1376 = vunpack.c.l.b16 %v373
        %v1377 = vunpack.c.h.b16 %v373
        %v1378 = vunpack.c.l.b16 %v374
        %v1379 = vunpack.c.h.b16 %v374
        %v1380 = vunpack.c.l.b16 %v375
        %v1381 = vunpack.c.h.b16 %v375
        %v1382 = vunpack.c.l.b16 %v376
        %v1383 = vunpack.c.h.b16 %v376
        %v1384 = vunpack.c.l.b16 %v377
        %v1385 = vunpack.c.h.b16 %v377
        %v1386 = vunpack.c.l.b16 %v378
        %v1387 = vunpack.c.h.b16 %v378
        %v1388 = vunpack.c.l.b16 %v379
        %v1389 = vunpack.c.h.b16 %v379
        %v1390 = vunpack.c.l.b16 %v380
        %v1391 = vunpack.c.h.b16 %v380
        %v1392 = vunpack.c.l.b16 %v381
        %v1393 = vunpack.c.h.b16 %v381
        %v1394 = vunpack.c.l.b16 %v382
        %v1395 = vunpack.c.h.b16 %v382
        %v1396 = vunpack.c.l.b16 %v383
        %v1397 = vunpack.c.h.b16 %v383
        %v1398 = vunpack.c.l.b16 %v384
        %v1399 = vunpack.c.h.b16 %v384
        %v1400 = vunpack.c.l.b16 %v385
        %v1401 = vunpack.c.h.b16 %v385
        %v1402 = vunpack.c.l.b16 %v386
        %v1403 = vunpack.c.h.b16 %v386
        %v1404 = vunpack.c.l.b16 %v387
        %v1405 = vunpack.c.h.b16 %v387
        %v1406 = vunpack.c.l.b16 %v388
        %v1407 = vunpack.c.h.b16 %v388
        %v1408 = vunpack.c.l.b16 %v389
        %v1409 = vunpack.c.h.b16 %v389
        %v1410 = vunpack.c.l.b16 %v390
        %v1411 = vunpack.c.h.b16 %v390
        %v1412 = vunpack.c.l.b16 %v391
        %v1413 = vunpack.c.h.b16 %v391
        %v1414 = vunpack.c.l.b16 %v392
        %v1415 = vunpack.c.h.b16 %v392
        %v1416 = vunpack.c.l.b16 %v393
        %v1417 = vunpack.c.h.b16 %v393
        %v1418 = vunpack.c.l.b16 %v394
        %v1419 = vunpack.c.h.b16 %v394
        %v1420 = vunpack.c.l.b16 %v395
        %v1421 = vunpack.c.h.b16 %v395
        %v1422 = vunpack.c.l.b16 %v396
        %v1423 = vunpack.c.h.b16 %v396
        %v1424 = vunpack.c.l.b16 %v397
        %v1425 = vunpack.c.h.b16 %v397
        %v1426 = vunpack.c.l.b16 %v398
        %v1427 = vunpack.c.h.b16 %v398
        %v1428 = vunpack.c.l.b16 %v399
        %v1429 = vunpack.c.h.b16 %v399
        %v1430 = vunpack.c.l.b16 %v400
        %v1431 = vunpack.c.h.b16 %v400
        %v1432 = vunpack.c.l.b16 %v401
        %v1433 = vunpack.c.h.b16 %v401
        %v1434 = vunpack.c.l.b16 %v402
        %v1435 = vunpack.c.h.b16 %v402
        %v1436 = vunpack.c.l.b16 %v403
        %v1437 = vunpack.c.h.b16 %v403
        %v1438 = vunpack.c.l.b16 %v404
        %v1439 = vunpack.c.h.b16 %v404
        %v1440 = vunpack.c.l.b16 %v405
        %v1441 = vunpack.c.h.b16 %v405
        %v1442 = vunpack.c.l.b16 %v406
        %v1443 = vunpack.c.h.b16 %v406
        %v1444 = vunpack.c.l.b16 %v407
        %v1445 = vunpack.c.h.b16 %v407
        %v1446 = vunpack.c.l.b16 %v408
        %v1447 = vunpack.c.h.b16 %v408
        %v1448 = vunpack.c.l.b16 %v409
        %v1449 = vunpack.c.h.b16 %v409
        %v1450 = vunpack.c.l.b16 %v410
        %v1451 = vunpack.c.h.b16 %v410
        %v1452 = vunpack.c.l.b16 %v411
        %v1453 = vunpack.c.h.b16 %v411
        %v1454 = vunpack.c.l.b16 %v412
        %v1455 = vunpack.c.h.b16 %v412
        %v1456 = vunpack.c.l.b16 %v413
        %v1457 = vunpack.c.h.b16 %v413
        %v1458 = vunpack.c.l.b16 %v414
        %v1459 = vunpack.c.h.b16 %v414
        %v1460 = vunpack.c.l.b16 %v415
        %v1461 = vunpack.c.h.b16 %v415
        %v1462 = vunpack.c.l.b16 %v416
        %v1463 = vunpack.c.h.b16 %v416
        %v1464 = vunpack.c.l.b16 %v417
        %v1465 = vunpack.c.h.b16 %v417
        %v1466 = vunpack.c.l.b16 %v418
        %v1467 = vunpack.c.h.b16 %v418
        %v1468 = vunpack.c.l.b16 %v419
        %v1469 = vunpack.c.h.b16 %v419
        %v1470 = vunpack.c.l.b16 %v420
        %v1471 = vunpack.c.h.b16 %v420
        %v1472 = vunpack.c.l.b16 %v421
        %v1473 = vunpack.c.h.b16 %v421
        %v1474 = vunpack.c.l.b16 %v422
        %v1475 = vunpack.c.h.b16 %v422
        %v1476 = vunpack.c.l.b16 %v423
        %v1477 = vunpack.c.h.b16 %v423
        %v1478 = vunpack.c.l.b16 %v424
        %v1479 = vunpack.c.h.b16 %v424
        %v1480 = vunpack.c.l.b16 %v425
        %v1481 = vunpack.c.h.b16 %v425
        %v1482 = vunpack.c.l.b16 %v426
        %v1483 = vunpack.c.h.b16 %v426
        %v1484 = vunpack.c.l.b16 %v427
        %v1485 = vunpack.c.h.b16 %v427
        %v1486 = vunpack.c.l.b16 %v428
        %v1487 = vunpack.c.h.b16 %v428
        %v1488 = vunpack.c.l.b16 %v429
        %v1489 = vunpack.c.h.b16 %v429
        %v1490 = vunpack.c.l.b16 %v430
        %v1491 = vunpack.c.h.b16 %v430
        %v1492 = vunpack.c.l.b16 %v431
        %v1493 = vunpack.c.h.b16 %v431
        %v1494 = vunpack.c.l.b16 %v432
        %v1495 = vunpack.c.h.b16 %v432
        %v1496 = vunpack.c.l.b16 %v433
        %v1497 = vunpack.c.h.b16 %v433
        %v1498 = vunpack.c.l.b16 %v434
        %v1499 = vunpack.c.h.b16 %v434
        %v1500 = vunpack.c.l.b16 %v435
        %v1501 = vunpack.c.h.b16 %v435
        %v1502 = vunpack.c.l.b16 %v436
        %v1503 = vunpack.c.h.b16 %v436
        %v1504 = vunpack.c.l.b16 %v437
        %v1505 = vunpack.c.h.b16 %v437
        %v1506 = vunpack.c.l.b16 %v438
        %v1507 = vunpack.c.h.b16 %v438
        %v1508 = vunpack.c.l.b16 %v439
        %v1509 = vunpack.c.h.b16 %v439
        %v1510 = vunpack.c.l.b16 %v440
        %v1511 = vunpack.c.h.b16 %v440
        %v1512 = vunpack.c.l.b16 %v441
        %v1513 = vunpack.c.h.b16 %v441
        %v1514 = vunpack.c.l.b16 %v442
        %v1515 = vunpack.c.h.b16 %v442
        %v1516 = vunpack.c.l.b16 %v443
        %v1517 = vunpack.c.h.b16 %v443
        %v1518 = vunpack.c.l.b16 %v444
        %v1519 = vunpack.c.h.b16 %v444
        %v1520 = vunpack.c.l.b16 %v445
        %v1521 = vunpack.c.h.b16 %v445
        %v1522 = vunpack.c.l.b16 %v446
        %v1523 = vunpack.c.h.b16 %v446
        %v1524 = vunpack.c.l.b16 %v447
        %v1525 = vunpack.c.h.b16 %v447
        %v1526 = vunpack.c.l.b16 %v448
        %v1527 = vunpack.c.h.b16 %v448
        %v1528 = vunpack.c.l.b16 %v449
        %v1529 = vunpack.c.h.b16 %v449
        %v1530 = vunpack.c.l.b16 %v450
        %v1531 = vunpack.c.h.b16 %v450
        %v1532 = vunpack.c.l.b16 %v451
        %v1533 = vunpack.c.h.b16 %v451
        %v1534 = vunpack.c.l.b16 %v452
        %v1535 = vunpack.c.h.b16 %v452
        %v1536 = vunpack.c.l.b16 %v453
        %v1537 = vunpack.c.h.b16 %v453
        %v1538 = vunpack.c.l.b16 %v454
        %v1539 = vunpack.c.h.b16 %v454
        %v1540 = vunpack.c.l.b16 %v455
        %v1541 = vunpack.c.h.b16 %v455
        %v1542 = vunpack.c.l.b16 %v456
        %v1543 = vunpack.c.h.b16 %v456
        %v1544 = vunpack.c.l.b16 %v457
        %v1545 = vunpack.c.h.b16 %v457
        %v1546 = vunpack.c.l.b16 %v458
        %v1547 = vunpack.c.h.b16 %v458
        %v1548 = vunpack.c.l.b16 %v459
        %v1549 = vunpack.c.h.b16 %v459
        %v1550 = vunpack.c.l.b16 %v460
        %v1551 = vunpack.c.h.b16 %v460
        %v1552 = vunpack.c.l.b16 %v461
        %v1553 = vunpack.c.h.b16 %v461
        %v1554 = vunpack.c.l.b16 %v462
        %v1555 = vunpack.c.h.b16 %v462
        %v1556 = vunpack.c.l.b16 %v463
        %v1557 = vunpack.c.h.b16 %v463
        %v1558 = vunpack.c.l.b16 %v464
        %v1559 = vunpack.c.h.b16 %v464
        %v1560 = vunpack.c.l.b16 %v465
        %v1561 = vunpack.c.h.b16 %v465
        %v1562 = vunpack.c.l.b16 %v466
        %v1563 = vunpack.c.h.b16 %v466
        %v1564 = vunpack.c.l.b16 %v467
        %v1565 = vunpack.c.h.b16 %v467
        %v1566 = vunpack.c.l.b16 %v468
        %v1567 = vunpack.c.h.b16 %v468
        %v1568 = vunpack.c.l.b16 %v469
        %v1569 = vunpack.c.h.b16 %v469
        %v1570 = vunpack.c.l.b16 %v470
        %v1571 = vunpack.c.h.b16 %v470
        %v1572 = vunpack.c.l.b16 %v471
        %v1573 = vunpack.c.h.b16 %v471
        %v1574 = vunpack.c.l.b16 %v472
        %v1575 = vunpack.c.h.b16 %v472
        %v1576 = vunpack.c.l.b16 %v473
        %v1577 = vunpack.c.h.b16 %v473
        %v1578 = vunpack.c.l.b16 %v474
        %v1579 = vunpack.c.h.b16 %v474
        %v1580 = vunpack.c.l.b16 %v475
        %v1581 = vunpack.c.h.b16 %v475
        %v1582 = vunpack.c.l.b16 %v476
        %v1583 = vunpack.c.h.b16 %v476
        %v1584 = vunpack.c.l.b16 %v477
        %v1585 = vunpack.c.h.b16 %v477
        %v1586 = vunpack.c.l.b16 %v478
        %v1587 = vunpack.c.h.b16 %v478
        %v1588 = vunpack.c.l.b16 %v479
        %v1589 = vunpack.c.h.b16 %v479
        %v1590 = vunpack.c.l.b16 %v480
        %v1591 = vunpack.c.h.b16 %v480
        %v1592 = vunpack.c.l.b16 %v481
        %v1593 = vunpack.c.h.b16 %v481
        %v1594 = vunpack.c.l.b16 %v482
        %v1595 = vunpack.c.h.b16 %v482
        %v1596 = vunpack.c.l.b16 %v483
        %v1597 = vunpack.c.h.b16 %v483
        %v1598 = vunpack.c.l.b16 %v484
        %v1599 = vunpack.c.h.b16 %v484
        %v1600 = vunpack.c.l.b16 %v485
        %v1601 = vunpack.c.h.b16 %v485
        %v1602 = vunpack.c.l.b16 %v486
        %v1603 = vunpack.c.h.b16 %v486
        %v1604 = vunpack.c.l.b16 %v487
        %v1605 = vunpack.c.h.b16 %v487
        %v1606 = vunpack.c.l.b16 %v488
        %v1607 = vunpack.c.h.b16 %v488
        %v1608 = vunpack.c.l.b16 %v489
        %v1609 = vunpack.c.h.b16 %v489
        %v1610 = vunpack.c.l.b16 %v490
        %v1611 = vunpack.c.h.b16 %v490
        %v1612 = vunpack.c.l.b16 %v491
        %v1613 = vunpack.c.h.b16 %v491
        %v1614 = vunpack.c.l.b16 %v492
        %v1615 = vunpack.c.h.b16 %v492
        %v1616 = vunpack.c.l.b16 %v493
        %v1617 = vunpack.c.h.b16 %v493
        %v1618 = vunpack.c.l.b16 %v494
        %v1619 = vunpack.c.h.b16 %v494
        %v1620 = vunpack.c.l.b16 %v495
        %v1621 = vunpack.c.h.b16 %v495
        %v1622 = vunpack.c.l.b16 %v496
        %v1623 = vunpack.c.h.b16 %v496
        %v1624 = vunpack.c.l.b16 %v497
        %v1625 = vunpack.c.h.b16 %v497
        %v1626 = vunpack.c.l.b16 %v498
        %v1627 = vunpack.c.h.b16 %v498
        %v1628 = vunpack.c.l.b16 %v499
        %v1629 = vunpack.c.h.b16 %v499
        %v1630 = vunpack.c.l.b16 %v500
        %v1631 = vunpack.c.h.b16 %v500
        %v1632 = vunpack.c.l.b16 %v501
        %v1633 = vunpack.c.h.b16 %v501
        %v1634 = vunpack.c.l.b16 %v502
        %v1635 = vunpack.c.h.b16 %v502
        %v1636 = vunpack.c.l.b16 %v503
        %v1637 = vunpack.c.h.b16 %v503
        %v1638 = vunpack.c.l.b16 %v504
        %v1639 = vunpack.c.h.b16 %v504
        %v1640 = vunpack.c.l.b16 %v505
        %v1641 = vunpack.c.h.b16 %v505
        %v1642 = vunpack.c.l.b16 %v506
        %v1643 = vunpack.c.h.b16 %v506
        %v1644 = vunpack.c.l.b16 %v507
        %v1645 = vunpack.c.h.b16 %v507
        %v1646 = vunpack.c.l.b16 %v508
        %v1647 = vunpack.c.h.b16 %v508
        %v1648 = vunpack.c.l.b16 %v509
        %v1649 = vunpack.c.h.b16 %v509
        %v1650 = vunpack.c.l.b16 %v510
        %v1651 = vunpack.c.h.b16 %v510
        %v1652 = vunpack.c.l.b16 %v511
        %v1653 = vunpack.c.h.b16 %v511
        %v1654 = vunpack.c.l.b16 %v512
        %v1655 = vunpack.c.h.b16 %v512
        %v1656 = vunpack.c.l.b16 %v513
        %v1657 = vunpack.c.h.b16 %v513
        %v1658 = vunpack.c.l.b16 %v514
        %v1659 = vunpack.c.h.b16 %v514
        %v1660 = vunpack.c.l.b16 %v515
        %v1661 = vunpack.c.h.b16 %v515
        %v1662 = vunpack.c.l.b16 %v516
        %v1663 = vunpack.c.h.b16 %v516
        %v1664 = vunpack.c.l.b16 %v517
        %v1665 = vunpack.c.h.b16 %v517
        %v1666 = vunpack.c.l.b16 %v518
        %v1667 = vunpack.c.h.b16 %v518
        %v1668 = vunpack.c.l.b16 %v519
        %v1669 = vunpack.c.h.b16 %v519
        %v1670 = vunpack.c.l.b16 %v520
        %v1671 = vunpack.c.h.b16 %v520
        %v1672 = vunpack.c.l.b16 %v521
        %v1673 = vunpack.c.h.b16 %v521
        %v1674 = vunpack.c.l.b16 %v522
        %v1675 = vunpack.c.h.b16 %v522
        %v1676 = vunpack.c.l.b16 %v523
        %v1677 = vunpack.c.h.b16 %v523
        %v1678 = vunpack.c.l.b16 %v524
        %v1679 = vunpack.c.h.b16 %v524
        %v1680 = vunpack.c.l.b16 %v525
        %v1681 = vunpack.c.h.b16 %v525
        %v1682 = vunpack.c.l.b16 %v526
        %v1683 = vunpack.c.h.b16 %v526
        %v1684 = vunpack.c.l.b16 %v527
        %v1685 = vunpack.c.h.b16 %v527
        %v1686 = vunpack.c.l.b16 %v528
        %v1687 = vunpack.c.h.b16 %v528
        %v1688 = vunpack.c.l.b16 %v529
        %v1689 = vunpack.c.h.b16 %v529
        %v1690 = vunpack.c.l.b16 %v530
        %v1691 = vunpack.c.h.b16 %v530
        %v1692 = vunpack.c.l.b16 %v531
        %v1693 = vunpack.c.h.b16 %v531
        %v1694 = vunpack.c.l.b16 %v532
        %v1695 = vunpack.c.h.b16 %v532
        %v1696 = vunpack.c.l.b16 %v533
        %v1697 = vunpack.c.h.b16 %v533
        %v1698 = vunpack.c.l.b16 %v534
        %v1699 = vunpack.c.h.b16 %v534
        %v1700 = vunpack.c.l.b16 %v535
        %v1701 = vunpack.c.h.b16 %v535
        %v1702 = vunpack.c.l.b16 %v536
        %v1703 = vunpack.c.h.b16 %v536
        %v1704 = vunpack.c.l.b16 %v537
        %v1705 = vunpack.c.h.b16 %v537
        %v1706 = vunpack.c.l.b16 %v538
        %v1707 = vunpack.c.h.b16 %v538
        %v1708 = vunpack.c.l.b16 %v539
        %v1709 = vunpack.c.h.b16 %v539
        %v1710 = vunpack.c.l.b16 %v540
        %v1711 = vunpack.c.h.b16 %v540
        %v1712 = vunpack.c.l.b16 %v541
        %v1713 = vunpack.c.h.b16 %v541
        %v1714 = vunpack.c.l.b16 %v542
        %v1715 = vunpack.c.h.b16 %v542
        %v1716 = vunpack.c.l.b16 %v543
        %v1717 = vunpack.c.h.b16 %v543
        %v1718 = vunpack.c.l.b16 %v544
        %v1719 = vunpack.c.h.b16 %v544
        %v1720 = vunpack.c.l.b16 %v545
        %v1721 = vunpack.c.h.b16 %v545
        %v1722 = vunpack.c.l.b16 %v546
        %v1723 = vunpack.c.h.b16 %v546
        %v1724 = vunpack.c.l.b16 %v547
        %v1725 = vunpack.c.h.b16 %v547
        %v1726 = vunpack.c.l.b16 %v548
        %v1727 = vunpack.c.h.b16 %v548
        %v1728 = vunpack.c.l.b16 %v549
        %v1729 = vunpack.c.h.b16 %v549
        %v1730 = vunpack.c.l.b16 %v550
        %v1731 = vunpack.c.h.b16 %v550
        %v1732 = vunpack.c.l.b16 %v551
        %v1733 = vunpack.c.h.b16 %v551
        %v1734 = vunpack.c.l.b16 %v552
        %v1735 = vunpack.c.h.b16 %v552
        %v1736 = vunpack.c.l.b16 %v553
        %v1737 = vunpack.c.h.b16 %v553
        %v1738 = vunpack.c.l.b16 %v554
        %v1739 = vunpack.c.h.b16 %v554
        %v1740 = vunpack.c.l.b16 %v555
        %v1741 = vunpack.c.h.b16 %v555
        %v1742 = vunpack.c.l.b16 %v556
        %v1743 = vunpack.c.h.b16 %v556
        %v1744 = vunpack.c.l.b16 %v557
        %v1745 = vunpack.c.h.b16 %v557
        %v1746 = vunpack.c.l.b16 %v558
        %v1747 = vunpack.c.h.b16 %v558
        %v1748 = vunpack.c.l.b16 %v559
        %v1749 = vunpack.c.h.b16 %v559
        %v1750 = vunpack.c.l.b16 %v560
        %v1751 = vunpack.c.h.b16 %v560
        %v1752 = vunpack.c.l.b16 %v561
        %v1753 = vunpack.c.h.b16 %v561
        %v1754 = vunpack.c.l.b16 %v562
        %v1755 = vunpack.c.h.b16 %v562
        %v1756 = vunpack.c.l.b16 %v563
        %v1757 = vunpack.c.h.b16 %v563
        %v1758 = vunpack.c.l.b16 %v564
        %v1759 = vunpack.c.h.b16 %v564
        %v1760 = vunpack.c.l.b16 %v565
        %v1761 = vunpack.c.h.b16 %v565
        %v1762 = vunpack.c.l.b16 %v566
        %v1763 = vunpack.c.h.b16 %v566
        %v1764 = vunpack.c.l.b16 %v567
        %v1765 = vunpack.c.h.b16 %v567
        %v1766 = vunpack.c.l.b16 %v568
        %v1767 = vunpack.c.h.b16 %v568
        %v1768 = vunpack.c.l.b16 %v569
        %v1769 = vunpack.c.h.b16 %v569
        %v1770 = vunpack.c.l.b16 %v570
        %v1771 = vunpack.c.h.b16 %v570
        %v1772 = vunpack.c.l.b16 %v571
        %v1773 = vunpack.c.h.b16 %v571
        %v1774 = vunpack.c.l.b16 %v572
        %v1775 = vunpack.c.h.b16 %v572
        %v1776 = vunpack.c.l.b16 %v573
        %v1777 = vunpack.c.h.b16 %v573
        %v1778 = vunpack.c.l.b16 %v574
        %v1779 = vunpack.c.h.b16 %v574
        %v1780 = vunpack.c.l.b16 %v575
        %v1781 = vunpack.c.h.b16 %v575
        %v1782 = vunpack.c.l.b16 %v576
        %v1783 = vunpack.c.h.b16 %v576
        %v1784 = vunpack.c.l.b16 %v577
        %v1785 = vunpack.c.h.b16 %v577
        %v1786 = vunpack.c.l.b16 %v578
        %v1787 = vunpack.c.h.b16 %v578
        %v1788 = vunpack.c.l.b16 %v579
        %v1789 = vunpack.c.h.b16 %v579
        %v1790 = vunpack.c.l.b16 %v580
        %v1791 = vunpack.c.h.b16 %v580
        %v1792 = vunpack.c.l.b16 %v581
        %v1793 = vunpack.c.h.b16 %v581
        %v1794 = vunpack.c.l.b16 %v582
        %v1795 = vunpack.c.h.b16 %v582
        %v1796 = vunpack.c.l.b16 %v583
        %v1797 = vunpack.c.h.b16 %v583
        %v1798 = vunpack.c.l.b16 %v584
        %v1799 = vunpack.c.h.b16 %v584
        %v1800 = vunpack.c.l.b16 %v585
        %v1801 = vunpack.c.h.b16 %v585
        %v1802 = vunpack.c.l.b16 %v586
        %v1803 = vunpack.c.h.b16 %v586
        %v1804 = vunpack.c.l.b16 %v587
        %v1805 = vunpack.c.h.b16 %v587
        %v1806 = vunpack.c.l.b16 %v588
        %v1807 = vunpack.c.h.b16 %v588
        %v1808 = vunpack.c.l.b16 %v589
        %v1809 = vunpack.c.h.b16 %v589
        %v1810 = vunpack.c.l.b16 %v590
        %v1811 = vunpack.c.h.b16 %v590
        %v1812 = vunpack.c.l.b16 %v591
        %v1813 = vunpack.c.h.b16 %v591
        %v1814 = vunpack.c.l.b16 %v592
        %v1815 = vunpack.c.h.b16 %v592
        %v1816 = vunpack.c.l.b16 %v593
        %v1817 = vunpack.c.h.b16 %v593
        %v1818 = vunpack.c.l.b16 %v594
        %v1819 = vunpack.c.h.b16 %v594
        %v1820 = vunpack.c.l.b16 %v595
        %v1821 = vunpack.c.h.b16 %v595
        %v1822 = vunpack.c.l.b16 %v596
        %v1823 = vunpack.c.h.b16 %v596
        %v1824 = vunpack.c.l.b16 %v597
        %v1825 = vunpack.c.h.b16 %v597
        %v1826 = vunpack.c.l.b16 %v598
        %v1827 = vunpack.c.h.b16 %v598
        %v1828 = vunpack.c.l.b16 %v599
        %v1829 = vunpack.c.h.b16 %v599
        %v1830 = vpack.c.b16 %v1074, %v1062
        %v1831 = vpack.c.b16 %v1075, %v1063
        %v1832 = vpack.c.b16 %v1076, %v1064
        %v1833 = vpack.c.b16 %v1077, %v1065
        %v1834 = vpack.c.b16 %v1078, %v1066
        %v1835 = vpack.c.b16 %v1079, %v1067
        %v1836 = vpack.c.b16 %v1080, %v1068
        %v1837 = vpack.c.b16 %v1081, %v1069
        %v1838 = vpack.c.b16 %v1082, %v1070
        %v1839 = vpack.c.b16 %v1083, %v1071
        %v1840 = vpack.c.b16 %v1084, %v1072
        %v1841 = vpack.c.b16 %v1085, %v1073
        %v1842 = vpack.c.b16 %v1098, %v1086
        %v1843 = vpack.c.b16 %v1099, %v1087
        %v1844 = vpack.c.b16 %v1100, %v1088
        %v1845 = vpack.c.b16 %v1101, %v1089
        %v1846 = vpack.c.b16 %v1102, %v1090
        %v1847 = vpack.c.b16 %v1103, %v1091
        %v1848 = vpack.c.b16 %v1104, %v1092
        %v1849 = vpack.c.b16 %v1105, %v1093
        %v1850 = vpack.c.b16 %v1106, %v1094
        %v1851 = vpack.c.b16 %v1107, %v1095
        %v1852 = vpack.c.b16 %v1108, %v1096
        %v1853 = vpack.c.b16 %v1109, %v1097
        %v1854 = vpack.c.b16 %v1122, %v1110
        %v1855 = vpack.c.b16 %v1123, %v1111
        %v1856 = vpack.c.b16 %v1124, %v1112
        %v1857 = vpack.c.b16 %v1125, %v1113
        %v1858 = vpack.c.b16 %v1126, %v1114
        %v1859 = vpack.c.b16 %v1127, %v1115
        %v1860 = vpack.c.b16 %v1128, %v1116
        %v1861 = vpack.c.b16 %v1129, %v1117
        %v1862 = vpack.c.b16 %v1130, %v1118
        %v1863 = vpack.c.b16 %v1131, %v1119
        %v1864 = vpack.c.b16 %v1132, %v1120
        %v1865 = vpack.c.b16 %v1133, %v1121
        %v1866 = vpack.c.b16 %v1146, %v1134
        %v1867 = vpack.c.b16 %v1147, %v1135
        %v1868 = vpack.c.b16 %v1148, %v1136
        %v1869 = vpack.c.b16 %v1149, %v1137
        %v1870 = vpack.c.b16 %v1150, %v1138
        %v1871 = vpack.c.b16 %v1151, %v1139
        %v1872 = vpack.c.b16 %v1152, %v1140
        %v1873 = vpack.c.b16 %v1153, %v1141
        %v1874 = vpack.c.b16 %v1154, %v1142
        %v1875 = vpack.c.b16 %v1155, %v1143
        %v1876 = vpack.c.b16 %v1156, %v1144
        %v1877 = vpack.c.b16 %v1157, %v1145
        %v1878 = vpack.c.b16 %v1170, %v1158
        %v1879 = vpack.c.b16 %v1171, %v1159
        %v1880 = vpack.c.b16 %v1172, %v1160
        %v1881 = vpack.c.b16 %v1173, %v1161
        %v1882 = vpack.c.b16 %v1174, %v1162
        %v1883 = vpack.c.b16 %v1175, %v1163
        %v1884 = vpack.c.b16 %v1176, %v1164
        %v1885 = vpack.c.b16 %v1177, %v1165
        %v1886 = vpack.c.b16 %v1178, %v1166
        %v1887 = vpack.c.b16 %v1179, %v1167
        %v1888 = vpack.c.b16 %v1180, %v1168
        %v1889 = vpack.c.b16 %v1181, %v1169
        %v1890 = vpack.c.b16 %v1194, %v1182
        %v1891 = vpack.c.b16 %v1195, %v1183
        %v1892 = vpack.c.b16 %v1196, %v1184
        %v1893 = vpack.c.b16 %v1197, %v1185
        %v1894 = vpack.c.b16 %v1198, %v1186
        %v1895 = vpack.c.b16 %v1199, %v1187
        %v1896 = vpack.c.b16 %v1200, %v1188
        %v1897 = vpack.c.b16 %v1201, %v1189
        %v1898 = vpack.c.b16 %v1202, %v1190
        %v1899 = vpack.c.b16 %v1203, %v1191
        %v1900 = vpack.c.b16 %v1204, %v1192
        %v1901 = vpack.c.b16 %v1205, %v1193
        %v1902 = vpack.c.b16 %v1218, %v1206
        %v1903 = vpack.c.b16 %v1219, %v1207
        %v1904 = vpack.c.b16 %v1220, %v1208
        %v1905 = vpack.c.b16 %v1221, %v1209
        %v1906 = vpack.c.b16 %v1222, %v1210
        %v1907 = vpack.c.b16 %v1223, %v1211
        %v1908 = vpack.c.b16 %v1224, %v1212
        %v1909 = vpack.c.b16 %v1225, %v1213
        %v1910 = vpack.c.b16 %v1226, %v1214
        %v1911 = vpack.c.b16 %v1227, %v1215
        %v1912 = vpack.c.b16 %v1228, %v1216
        %v1913 = vpack.c.b16 %v1229, %v1217
        %v1914 = vpack.c.b16 %v1242, %v1230
        %v1915 = vpack.c.b16 %v1243, %v1231
        %v1916 = vpack.c.b16 %v1244, %v1232
        %v1917 = vpack.c.b16 %v1245, %v1233
        %v1918 = vpack.c.b16 %v1246, %v1234
        %v1919 = vpack.c.b16 %v1247, %v1235
        %v1920 = vpack.c.b16 %v1248, %v1236
        %v1921 = vpack.c.b16 %v1249, %v1237
        %v1922 = vpack.c.b16 %v1250, %v1238
        %v1923 = vpack.c.b16 %v1251, %v1239
        %v1924 = vpack.c.b16 %v1252, %v1240
        %v1925 = vpack.c.b16 %v1253, %v1241
        %v1926 = vpack.c.b16 %v1266, %v1254
        %v1927 = vpack.c.b16 %v1267, %v1255
        %v1928 = vpack.c.b16 %v1268, %v1256
        %v1929 = vpack.c.b16 %v1269, %v1257
        %v1930 = vpack.c.b16 %v1270, %v1258
        %v1931 = vpack.c.b16 %v1271, %v1259
        %v1932 = vpack.c.b16 %v1272, %v1260
        %v1933 = vpack.c.b16 %v1273, %v1261
        %v1934 = vpack.c.b16 %v1274, %v1262
        %v1935 = vpack.c.b16 %v1275, %v1263
        %v1936 = vpack.c.b16 %v1276, %v1264
        %v1937 = vpack.c.b16 %v1277, %v1265
        %v1938 = vpack.c.b16 %v1290, %v1278
        %v1939 = vpack.c.b16 %v1291, %v1279
        %v1940 = vpack.c.b16 %v1292, %v1280
        %v1941 = vpack.c.b16 %v1293, %v1281
        %v1942 = vpack.c.b16 %v1294, %v1282
        %v1943 = vpack.c.b16 %v1295, %v1283
        %v1944 = vpack.c.b16 %v1296, %v1284
        %v1945 = vpack.c.b16 %v1297, %v1285
        %v1946 = vpack.c.b16 %v1298, %v1286
        %v1947 = vpack.c.b16 %v1299, %v1287
        %v1948 = vpack.c.b16 %v1300, %v1288
        %v1949 = vpack.c.b16 %v1301, %v1289
        %v1950 = vpack.c.b16 %v1314, %v1302
        %v1951 = vpack.c.b16 %v1315, %v1303
        %v1952 = vpack.c.b16 %v1316, %v1304
        %v1953 = vpack.c.b16 %v1317, %v1305
        %v1954 = vpack.c.b16 %v1318, %v1306
        %v1955 = vpack.c.b16 %v1319, %v1307
        %v1956 = vpack.c.b16 %v1320, %v1308
        %v1957 = vpack.c.b16 %v1321, %v1309
        %v1958 = vpack.c.b16 %v1322, %v1310
        %v1959 = vpack.c.b16 %v1323, %v1311
        %v1960 = vpack.c.b16 %v1324, %v1312
        %v1961 = vpack.c.b16 %v1325, %v1313
        %v1962 = vpack.c.b16 %v1338, %v1326
        %v1963 = vpack.c.b16 %v1339, %v1327
        %v1964 = vpack.c.b16 %v1340, %v1328
        %v1965 = vpack.c.b16 %v1341, %v1329
        %v1966 = vpack.c.b16 %v1342, %v1330
        %v1967 = vpack.c.b16 %v1343, %v1331
        %v1968 = vpack.c.b16 %v1344, %v1332
        %v1969 = vpack.c.b16 %v1345, %v1333
        %v1970 = vpack.c.b16 %v1346, %v1334
        %v1971 = vpack.c.b16 %v1347, %v1335
        %v1972 = vpack.c.b16 %v1348, %v1336
        %v1973 = vpack.c.b16 %v1349, %v1337
        %v1974 = vpack.c.b16 %v1362, %v1350
        %v1975 = vpack.c.b16 %v1363, %v1351
        %v1976 = vpack.c.b16 %v1364, %v1352
        %v1977 = vpack.c.b16 %v1365, %v1353
        %v1978 = vpack.c.b16 %v1366, %v1354
        %v1979 = vpack.c.b16 %v1367, %v1355
        %v1980 = vpack.c.b16 %v1368, %v1356
        %v1981 = vpack.c.b16 %v1369, %v1357
        %v1982 = vpack.c.b16 %v1370, %v1358
        %v1983 = vpack.c.b16 %v1371, %v1359
        %v1984 = vpack.c.b16 %v1372, %v1360
        %v1985 = vpack.c.b16 %v1373, %v1361
        %v1986 = vpack.c.b16 %v1386, %v1374
        %v1987 = vpack.c.b16 %v1387, %v1375
        %v1988 = vpack.c.b16 %v1388, %v1376
        %v1989 = vpack.c.b16 %v1389, %v1377
        %v1990 = vpack.c.b16 %v1390, %v1378
        %v1991 = vpack.c.b16 %v1391, %v1379
        %v1992 = vpack.c.b16 %v1392, %v1380
        %v1993 = vpack.c.b16 %v1393, %v1381
        %v1994 = vpack.c.b16 %v1394, %v1382
        %v1995 = vpack.c.b16 %v1395, %v1383
        %v1996 = vpack.c.b16 %v1396, %v1384
        %v1997 = vpack.c.b16 %v1397, %v1385
        %v1998 = vpack.c.b16 %v1410, %v1398
        %v1999 = vpack.c.b16 %v1411, %v1399
        %v2000 = vpack.c.b16 %v1412, %v1400
        %v2001 = vpack.c.b16 %v1413, %v1401
        %v2002 = vpack.c.b16 %v1414, %v1402
        %v2003 = vpack.c.b16 %v1415, %v1403
        %v2004 = vpack.c.b16 %v1416, %v1404
        %v2005 = vpack.c.b16 %v1417, %v1405
        %v2006 = vpack.c.b16 %v1418, %v1406
        %v2007 = vpack.c.b16 %v1419, %v1407
        %v2008 = vpack.c.b16 %v1420, %v1408
        %v2009 = vpack.c.b16 %v1421, %v1409
        %v2010 = vpack.c.b16 %v1434, %v1422
        %v2011 = vpack.c.b16 %v1435, %v1423
        %v2012 = vpack.c.b16 %v1436, %v1424
        %v2013 = vpack.c.b16 %v1437, %v1425
        %v2014 = vpack.c.b16 %v1438, %v1426
        %v2015 = vpack.c.b16 %v1439, %v1427
        %v2016 = vpack.c.b16 %v1440, %v1428
        %v2017 = vpack.c.b16 %v1441, %v1429
        %v2018 = vpack.c.b16 %v1442, %v1430
        %v2019 = vpack.c.b16 %v1443, %v1431
        %v2020 = vpack.c.b16 %v1444, %v1432
        %v2021 = vpack.c.b16 %v1445, %v1433
        %v2022 = vpack.c.b16 %v1458, %v1446
        %v2023 = vpack.c.b16 %v1459, %v1447
        %v2024 = vpack.c.b16 %v1460, %v1448
        %v2025 = vpack.c.b16 %v1461, %v1449
        %v2026 = vpack.c.b16 %v1462, %v1450
        %v2027 = vpack.c.b16 %v1463, %v1451
        %v2028 = vpack.c.b16 %v1464, %v1452
        %v2029 = vpack.c.b16 %v1465, %v1453
        %v2030 = vpack.c.b16 %v1466, %v1454
        %v2031 = vpack.c.b16 %v1467, %v1455
        %v2032 = vpack.c.b16 %v1468, %v1456
        %v2033 = vpack.c.b16 %v1469, %v1457
        %v2034 = vpack.c.b16 %v1482, %v1470
        %v2035 = vpack.c.b16 %v1483, %v1471
        %v2036 = vpack.c.b16 %v1484, %v1472
        %v2037 = vpack.c.b16 %v1485, %v1473
        %v2038 = vpack.c.b16 %v1486, %v1474
        %v2039 = vpack.c.b16 %v1487, %v1475
        %v2040 = vpack.c.b16 %v1488, %v1476
        %v2041 = vpack.c.b16 %v1489, %v1477
        %v2042 = vpack.c.b16 %v1490, %v1478
        %v2043 = vpack.c.b16 %v1491, %v1479
        %v2044 = vpack.c.b16 %v1492, %v1480
        %v2045 = vpack.c.b16 %v1493, %v1481
        %v2046 = vpack.c.b16 %v1506, %v1494
        %v2047 = vpack.c.b16 %v1507, %v1495
        %v2048 = vpack.c.b16 %v1508, %v1496
        %v2049 = vpack.c.b16 %v1509, %v1497
        %v2050 = vpack.c.b16 %v1510, %v1498
        %v2051 = vpack.c.b16 %v1511, %v1499
        %v2052 = vpack.c.b16 %v1512, %v1500
        %v2053 = vpack.c.b16 %v1513, %v1501
        %v2054 = vpack.c.b16 %v1514, %v1502
        %v2055 = vpack.c.b16 %v1515, %v1503
        %v2056 = vpack.c.b16 %v1516, %v1504
        %v2057 = vpack.c.b16 %v1517, %v1505
        %v2058 = vpack.c.b16 %v1530, %v1518
        %v2059 = vpack.c.b16 %v1531, %v1519
        %v2060 = vpack.c.b16 %v1532, %v1520
        %v2061 = vpack.c.b16 %v1533, %v1521
        %v2062 = vpack.c.b16 %v1534, %v1522
        %v2063 = vpack.c.b16 %v1535, %v1523
        %v2064 = vpack.c.b16 %v1536, %v1524
        %v2065 = vpack.c.b16 %v1537, %v1525
        %v2066 = vpack.c.b16 %v1538, %v1526
        %v2067 = vpack.c.b16 %v1539, %v1527
        %v2068 = vpack.c.b16 %v1540, %v1528
        %v2069 = vpack.c.b16 %v1541, %v1529
        %v2070 = vpack.c.b16 %v1554, %v1542
        %v2071 = vpack.c.b16 %v1555, %v1543
        %v2072 = vpack.c.b16 %v1556, %v1544
        %v2073 = vpack.c.b16 %v1557, %v1545
        %v2074 = vpack.c.b16 %v1558, %v1546
        %v2075 = vpack.c.b16 %v1559, %v1547
        %v2076 = vpack.c.b16 %v1560, %v1548
        %v2077 = vpack.c.b16 %v1561, %v1549
        %v2078 = vpack.c.b16 %v1562, %v1550
        %v2079 = vpack.c.b16 %v1563, %v1551
        %v2080 = vpack.c.b16 %v1564, %v1552
        %v2081 = vpack.c.b16 %v1565, %v1553
        %v2082 = vpack.c.b16 %v1578, %v1566
        %v2083 = vpack.c.b16 %v1579, %v1567
        %v2084 = vpack.c.b16 %v1580, %v1568
        %v2085 = vpack.c.b16 %v1581, %v1569
        %v2086 = vpack.c.b16 %v1582, %v1570
        %v2087 = vpack.c.b16 %v1583, %v1571
        %v2088 = vpack.c.b16 %v1584, %v1572
        %v2089 = vpack.c.b16 %v1585, %v1573
        %v2090 = vpack.c.b16 %v1586, %v1574
        %v2091 = vpack.c.b16 %v1587, %v1575
        %v2092 = vpack.c.b16 %v1588, %v1576
        %v2093 = vpack.c.b16 %v1589, %v1577
        %v2094 = vpack.c.b16 %v1602, %v1590
        %v2095 = vpack.c.b16 %v1603, %v1591
        %v2096 = vpack.c.b16 %v1604, %v1592
        %v2097 = vpack.c.b16 %v1605, %v1593
        %v2098 = vpack.c.b16 %v1606, %v1594
        %v2099 = vpack.c.b16 %v1607, %v1595
        %v2100 = vpack.c.b16 %v1608, %v1596
        %v2101 = vpack.c.b16 %v1609, %v1597
        %v2102 = vpack.c.b16 %v1610, %v1598
        %v2103 = vpack.c.b16 %v1611, %v1599
        %v2104 = vpack.c.b16 %v1612, %v1600
        %v2105 = vpack.c.b16 %v1613, %v1601
        %v2106 = vpack.c.b16 %v1626, %v1614
        %v2107 = vpack.c.b16 %v1627, %v1615
        %v2108 = vpack.c.b16 %v1628, %v1616
        %v2109 = vpack.c.b16 %v1629, %v1617
        %v2110 = vpack.c.b16 %v1630, %v1618
        %v2111 = vpack.c.b16 %v1631, %v1619
        %v2112 = vpack.c.b16 %v1632, %v1620
        %v2113 = vpack.c.b16 %v1633, %v1621
        %v2114 = vpack.c.b16 %v1634, %v1622
        %v2115 = vpack.c.b16 %v1635, %v1623
        %v2116 = vpack.c.b16 %v1636, %v1624
        %v2117 = vpack.c.b16 %v1637, %v1625
        %v2118 = vpack.c.b16 %v1650, %v1638
        %v2119 = vpack.c.b16 %v1651, %v1639
        %v2120 = vpack.c.b16 %v1652, %v1640
        %v2121 = vpack.c.b16 %v1653, %v1641
        %v2122 = vpack.c.b16 %v1654, %v1642
        %v2123 = vpack.c.b16 %v1655, %v1643
        %v2124 = vpack.c.b16 %v1656, %v1644
        %v2125 = vpack.c.b16 %v1657, %v1645
        %v2126 = vpack.c.b16 %v1658, %v1646
        %v2127 = vpack.c.b16 %v1659, %v1647
        %v2128 = vpack.c.b16 %v1660, %v1648
        %v2129 = vpack.c.b16 %v1661, %v1649
        %v2130 = vpack.c.b16 %v1674, %v1662
        %v2131 = vpack.c.b16 %v1675, %v1663
        %v2132 = vpack.c.b16 %v1676, %v1664
        %v2133 = vpack.c.b16 %v1677, %v1665
        %v2134 = vpack.c.b16 %v1678, %v1666
        %v2135 = vpack.c.b16 %v1679, %v1667
        %v2136 = vpack.c.b16 %v1680, %v1668
        %v2137 = vpack.c.b16 %v1681, %v1669
        %v2138 = vpack.c.b16 %v1682, %v1670
        %v2139 = vpack.c.b16 %v1683, %v1671
        %v2140 = vpack.c.b16 %v1684, %v1672
        %v2141 = vpack.c.b16 %v1685, %v1673
        %v2142 = vpack.c.b16 %v1698, %v1686
        %v2143 = vpack.c.b16 %v1699, %v1687
        %v2144 = vpack.c.b16 %v1700, %v1688
        %v2145 = vpack.c.b16 %v1701, %v1689
        %v2146 = vpack.c.b16 %v1702, %v1690
        %v2147 = vpack.c.b16 %v1703, %v1691
        %v2148 = vpack.c.b16 %v1704, %v1692
        %v2149 = vpack.c.b16 %v1705, %v1693
        %v2150 = vpack.c.b16 %v1706, %v1694
        %v2151 = vpack.c.b16 %v1707, %v1695
        %v2152 = vpack.c.b16 %v1708, %v1696
        %v2153 = vpack.c.b16 %v1709, %v1697
        %v2154 = vpack.c.b16 %v1722, %v1710
        %v2155 = vpack.c.b16 %v1723, %v1711
        %v2156 = vpack.c.b16 %v1724, %v1712
        %v2157 = vpack.c.b16 %v1725, %v1713
        %v2158 = vpack.c.b16 %v1726, %v1714
        %v2159 = vpack.c.b16 %v1727, %v1715
        %v2160 = vpack.c.b16 %v1728, %v1716
        %v2161 = vpack.c.b16 %v1729, %v1717
        %v2162 = vpack.c.b16 %v1730, %v1718
        %v2163 = vpack.c.b16 %v1731, %v1719
        %v2164 = vpack.c.b16 %v1732, %v1720
        %v2165 = vpack.c.b16 %v1733, %v1721
        %v2166 = vpack.c.b16 %v1746, %v1734
        %v2167 = vpack.c.b16 %v1747, %v1735
        %v2168 = vpack.c.b16 %v1748, %v1736
        %v2169 = vpack.c.b16 %v1749, %v1737
        %v2170 = vpack.c.b16 %v1750, %v1738
        %v2171 = vpack.c.b16 %v1751, %v1739
        %v2172 = vpack.c.b16 %v1752, %v1740
        %v2173 = vpack.c.b16 %v1753, %v1741
        %v2174 = vpack.c.b16 %v1754, %v1742
        %v2175 = vpack.c.b16 %v1755, %v1743
        %v2176 = vpack.c.b16 %v1756, %v1744
        %v2177 = vpack.c.b16 %v1757, %v1745
        %v2178 = vpack.c.b16 %v1770, %v1758
        %v2179 = vpack.c.b16 %v1771, %v1759
        %v2180 = vpack.c.b16 %v1772, %v1760
        %v2181 = vpack.c.b16 %v1773, %v1761
        %v2182 = vpack.c.b16 %v1774, %v1762
        %v2183 = vpack.c.b16 %v1775, %v1763
        %v2184 = vpack.c.b16 %v1776, %v1764
        %v2185 = vpack.c.b16 %v1777, %v1765
        %v2186 = vpack.c.b16 %v1778, %v1766
        %v2187 = vpack.c.b16 %v1779, %v1767
        %v2188 = vpack.c.b16 %v1780, %v1768
        %v2189 = vpack.c.b16 %v1781, %v1769
        %v2190 = vpack.c.b16 %v1794, %v1782
        %v2191 = vpack.c.b16 %v1795, %v1783
        %v2192 = vpack.c.b16 %v1796, %v1784
        %v2193 = vpack.c.b16 %v1797, %v1785
        %v2194 = vpack.c.b16 %v1798, %v1786
        %v2195 = vpack.c.b16 %v1799, %v1787
        %v2196 = vpack.c.b16 %v1800, %v1788
        %v2197 = vpack.c.b16 %v1801, %v1789
        %v2198 = vpack.c.b16 %v1802, %v1790
        %v2199 = vpack.c.b16 %v1803, %v1791
        %v2200 = vpack.c.b16 %v1804, %v1792
        %v2201 = vpack.c.b16 %v1805, %v1793
        %v2202 = vpack.c.b16 %v1818, %v1806
        %v2203 = vpack.c.b16 %v1819, %v1807
        %v2204 = vpack.c.b16 %v1820, %v1808
        %v2205 = vpack.c.b16 %v1821, %v1809
        %v2206 = vpack.c.b16 %v1822, %v1810
        %v2207 = vpack.c.b16 %v1823, %v1811
        %v2208 = vpack.c.b16 %v1824, %v1812
        %v2209 = vpack.c.b16 %v1825, %v1813
        %v2210 = vpack.c.b16 %v1826, %v1814
        %v2211 = vpack.c.b16 %v1827, %v1815
        %v2212 = vpack.c.b16 %v1828, %v1816
        %v2213 = vpack.c.b16 %v1829, %v1817
        %2598 = vmatprep.subr.bf16.mxu0 %v1831
        %2599 = vmatpush1.bf16.msra.mxu0 %v1830
        %2600 = vmatprep.subr.bf16.mxu0 %v1843
        %2601 = vmatpush1.bf16.msra.mxu0 %v1842
        %2602 = vmatprep.subr.bf16.mxu0 %v1855
        %2603 = vmatpush1.bf16.msra.mxu0 %v1854
        %2604 = vmatprep.subr.bf16.mxu0 %v1867
        %2605 = vmatpush1.bf16.msra.mxu0 %v1866
        %2606 = vmatprep.subr.bf16.mxu0 %v1879
        %2607 = vmatpush1.bf16.msra.mxu0 %v1878
        %2608 = vmatprep.subr.bf16.mxu0 %v1891
        %2609 = vmatpush1.bf16.msra.mxu0 %v1890
        %2610 = vmatprep.subr.bf16.mxu0 %v1903
        %2611 = vmatpush1.bf16.msra.mxu0 %v1902
        %2612 = vmatprep.subr.bf16.mxu0 %v1915
        %2613 = vmatpush1.bf16.msra.mxu0 %v1914
        %2614 = vmatprep.subr.bf16.mxu0 %v1927
        %2615 = vmatpush1.bf16.msra.mxu0 %v1926
        %2616 = vmatprep.subr.bf16.mxu0 %v1939
        %2617 = vmatpush1.bf16.msra.mxu0 %v1938
        %2618 = vmatprep.subr.bf16.mxu0 %v1951
        %2619 = vmatpush1.bf16.msra.mxu0 %v1950
        %2620 = vmatprep.subr.bf16.mxu0 %v1963
        %2621 = vmatpush1.bf16.msra.mxu0 %v1962
        %2622 = vmatprep.subr.bf16.mxu0 %v1975
        %2623 = vmatpush1.bf16.msra.mxu0 %v1974
        %2624 = vmatprep.subr.bf16.mxu0 %v1987
        %2625 = vmatpush1.bf16.msra.mxu0 %v1986
        %2626 = vmatprep.subr.bf16.mxu0 %v1999
        %2627 = vmatpush1.bf16.msra.mxu0 %v1998
        %2628 = vmatprep.subr.bf16.mxu0 %v2011
        %2629 = vmatpush1.bf16.msra.mxu0 %v2010
        %2630 = vmatprep.mubr.bf16.mxu0 %v671
        %2631 = vmatmul.mubr.bf16.gmra.mrb[0].mxu0 %v670
        %v2632 = vpop.f32.mrb[0].mxu0
        %v2633 = vadd.f32 %v607, %v2632
        %v2634 = vpop.f32.mrb[0].mxu0
        %v2635 = vadd.f32 %v611, %v2634
        %v2636 = vpop.f32.mrb[0].mxu0
        %v2637 = vpop.f32.mrb[0].mxu0
        %2638 = vdwg.mxu0
        %2639 = vmatprep.subr.bf16.mxu0 %v2023
        %2640 = vmatpush1.bf16.msra.mxu0 %v2022
        %2641 = vmatprep.subr.bf16.mxu0 %v2035
        %2642 = vmatpush1.bf16.msra.mxu0 %v2034
        %2643 = vmatprep.subr.bf16.mxu0 %v2047
        %2644 = vmatpush1.bf16.msra.mxu0 %v2046
        %2645 = vmatprep.subr.bf16.mxu0 %v2059
        %2646 = vmatpush1.bf16.msra.mxu0 %v2058
        %2647 = vmatprep.subr.bf16.mxu0 %v2071
        %2648 = vmatpush1.bf16.msra.mxu0 %v2070
        %2649 = vmatprep.subr.bf16.mxu0 %v2083
        %2650 = vmatpush1.bf16.msra.mxu0 %v2082
        %2651 = vmatprep.subr.bf16.mxu0 %v2095
        %2652 = vmatpush1.bf16.msra.mxu0 %v2094
        %2653 = vmatprep.subr.bf16.mxu0 %v2107
        %2654 = vmatpush1.bf16.msra.mxu0 %v2106
        %2655 = vmatprep.subr.bf16.mxu0 %v2119
        %2656 = vmatpush1.bf16.msra.mxu0 %v2118
        %2657 = vmatprep.subr.bf16.mxu0 %v2131
        %2658 = vmatpush1.bf16.msra.mxu0 %v2130
        %2659 = vmatprep.subr.bf16.mxu0 %v2143
        %2660 = vmatpush1.bf16.msra.mxu0 %v2142
        %2661 = vmatprep.subr.bf16.mxu0 %v2155
        %2662 = vmatpush1.bf16.msra.mxu0 %v2154
        %2663 = vmatprep.subr.bf16.mxu0 %v2167
        %2664 = vmatpush1.bf16.msra.mxu0 %v2166
        %2665 = vmatprep.subr.bf16.mxu0 %v2179
        %2666 = vmatpush1.bf16.msra.mxu0 %v2178
        %2667 = vmatprep.subr.bf16.mxu0 %v2191
        %2668 = vmatpush1.bf16.msra.mxu0 %v2190
        %2669 = vmatprep.subr.bf16.mxu0 %v2203
        %2670 = vmatpush1.bf16.msra.mxu0 %v2202
        %2671 = vmatprep.mubr.bf16.mxu0 %v673
        %2672 = vmatmul.mubr.bf16.gmra.mrb[0].mxu0 %v672
        %v2673 = vpop.f32.mrb[0].mxu0
        %v2674 = vadd.f32 %v2633, %v2673
        %v2675 = vpop.f32.mrb[0].mxu0
        %v2676 = vadd.f32 %v2635, %v2675
        %v2677 = vpop.f32.mrb[0].mxu0
        %v2678 = vpop.f32.mrb[0].mxu0
        %2679 = vdwg.mxu0
        %2680 = vmatprep.subr.bf16.mxu0 %v1833
        %2681 = vmatpush1.bf16.msra.mxu0 %v1832
        %2682 = vmatprep.subr.bf16.mxu0 %v1845
        %2683 = vmatpush1.bf16.msra.mxu0 %v1844
        %2684 = vmatprep.subr.bf16.mxu0 %v1857
        %2685 = vmatpush1.bf16.msra.mxu0 %v1856
        %2686 = vmatprep.subr.bf16.mxu0 %v1869
        %2687 = vmatpush1.bf16.msra.mxu0 %v1868
        %2688 = vmatprep.subr.bf16.mxu0 %v1881
        %2689 = vmatpush1.bf16.msra.mxu0 %v1880
        %2690 = vmatprep.subr.bf16.mxu0 %v1893
        %2691 = vmatpush1.bf16.msra.mxu0 %v1892
        %2692 = vmatprep.subr.bf16.mxu0 %v1905
        %2693 = vmatpush1.bf16.msra.mxu0 %v1904
        %2694 = vmatprep.subr.bf16.mxu0 %v1917
        %2695 = vmatpush1.bf16.msra.mxu0 %v1916
        %2696 = vmatprep.subr.bf16.mxu0 %v1929
        %2697 = vmatpush1.bf16.msra.mxu0 %v1928
        %2698 = vmatprep.subr.bf16.mxu0 %v1941
        %2699 = vmatpush1.bf16.msra.mxu0 %v1940
        %2700 = vmatprep.subr.bf16.mxu0 %v1953
        %2701 = vmatpush1.bf16.msra.mxu0 %v1952
        %2702 = vmatprep.subr.bf16.mxu0 %v1965
        %2703 = vmatpush1.bf16.msra.mxu0 %v1964
        %2704 = vmatprep.subr.bf16.mxu0 %v1977
        %2705 = vmatpush1.bf16.msra.mxu0 %v1976
        %2706 = vmatprep.subr.bf16.mxu0 %v1989
        %2707 = vmatpush1.bf16.msra.mxu0 %v1988
        %2708 = vmatprep.subr.bf16.mxu0 %v2001
        %2709 = vmatpush1.bf16.msra.mxu0 %v2000
        %2710 = vmatprep.subr.bf16.mxu0 %v2013
        %2711 = vmatpush1.bf16.msra.mxu0 %v2012
        %2712 = vmatprep.mubr.bf16.mxu0 %v671
        %2713 = vmatmul.mubr.bf16.gmra.mrb[0].mxu0 %v670
        %v2714 = vpop.f32.mrb[0].mxu0
        %v2715 = vadd.f32 %v615, %v2714
        %v2716 = vpop.f32.mrb[0].mxu0
        %v2717 = vadd.f32 %v619, %v2716
        %v2718 = vpop.f32.mrb[0].mxu0
        %v2719 = vpop.f32.mrb[0].mxu0
        %2720 = vdwg.mxu0
        %2721 = vmatprep.subr.bf16.mxu0 %v2025
        %2722 = vmatpush1.bf16.msra.mxu0 %v2024
        %2723 = vmatprep.subr.bf16.mxu0 %v2037
        %2724 = vmatpush1.bf16.msra.mxu0 %v2036
        %2725 = vmatprep.subr.bf16.mxu0 %v2049
        %2726 = vmatpush1.bf16.msra.mxu0 %v2048
        %2727 = vmatprep.subr.bf16.mxu0 %v2061
        %2728 = vmatpush1.bf16.msra.mxu0 %v2060
        %2729 = vmatprep.subr.bf16.mxu0 %v2073
        %2730 = vmatpush1.bf16.msra.mxu0 %v2072
        %2731 = vmatprep.subr.bf16.mxu0 %v2085
        %2732 = vmatpush1.bf16.msra.mxu0 %v2084
        %2733 = vmatprep.subr.bf16.mxu0 %v2097
        %2734 = vmatpush1.bf16.msra.mxu0 %v2096
        %2735 = vmatprep.subr.bf16.mxu0 %v2109
        %2736 = vmatpush1.bf16.msra.mxu0 %v2108
        %2737 = vmatprep.subr.bf16.mxu0 %v2121
        %2738 = vmatpush1.bf16.msra.mxu0 %v2120
        %2739 = vmatprep.subr.bf16.mxu0 %v2133
        %2740 = vmatpush1.bf16.msra.mxu0 %v2132
        %2741 = vmatprep.subr.bf16.mxu0 %v2145
        %2742 = vmatpush1.bf16.msra.mxu0 %v2144
        %2743 = vmatprep.subr.bf16.mxu0 %v2157
        %2744 = vmatpush1.bf16.msra.mxu0 %v2156
        %2745 = vmatprep.subr.bf16.mxu0 %v2169
        %2746 = vmatpush1.bf16.msra.mxu0 %v2168
        %2747 = vmatprep.subr.bf16.mxu0 %v2181
        %2748 = vmatpush1.bf16.msra.mxu0 %v2180
        %2749 = vmatprep.subr.bf16.mxu0 %v2193
        %2750 = vmatpush1.bf16.msra.mxu0 %v2192
        %2751 = vmatprep.subr.bf16.mxu0 %v2205
        %2752 = vmatpush1.bf16.msra.mxu0 %v2204
        %2753 = vmatprep.mubr.bf16.mxu0 %v673
        %2754 = vmatmul.mubr.bf16.gmra.mrb[0].mxu0 %v672
        %v2755 = vpop.f32.mrb[0].mxu0
        %v2756 = vadd.f32 %v2715, %v2755
        %v2757 = vpop.f32.mrb[0].mxu0
        %v2758 = vadd.f32 %v2717, %v2757
        %v2759 = vpop.f32.mrb[0].mxu0
        %v2760 = vpop.f32.mrb[0].mxu0
        %2761 = vdwg.mxu0
        %2762 = vmatprep.subr.bf16.mxu0 %v1835
        %2763 = vmatpush1.bf16.msra.mxu0 %v1834
        %2764 = vmatprep.subr.bf16.mxu0 %v1847
        %2765 = vmatpush1.bf16.msra.mxu0 %v1846
        %2766 = vmatprep.subr.bf16.mxu0 %v1859
        %2767 = vmatpush1.bf16.msra.mxu0 %v1858
        %2768 = vmatprep.subr.bf16.mxu0 %v1871
        %2769 = vmatpush1.bf16.msra.mxu0 %v1870
        %2770 = vmatprep.subr.bf16.mxu0 %v1883
        %2771 = vmatpush1.bf16.msra.mxu0 %v1882
        %2772 = vmatprep.subr.bf16.mxu0 %v1895
        %2773 = vmatpush1.bf16.msra.mxu0 %v1894
        %2774 = vmatprep.subr.bf16.mxu0 %v1907
        %2775 = vmatpush1.bf16.msra.mxu0 %v1906
        %2776 = vmatprep.subr.bf16.mxu0 %v1919
        %2777 = vmatpush1.bf16.msra.mxu0 %v1918
        %2778 = vmatprep.subr.bf16.mxu0 %v1931
        %2779 = vmatpush1.bf16.msra.mxu0 %v1930
        %2780 = vmatprep.subr.bf16.mxu0 %v1943
        %2781 = vmatpush1.bf16.msra.mxu0 %v1942
        %2782 = vmatprep.subr.bf16.mxu0 %v1955
        %2783 = vmatpush1.bf16.msra.mxu0 %v1954
        %2784 = vmatprep.subr.bf16.mxu0 %v1967
        %2785 = vmatpush1.bf16.msra.mxu0 %v1966
        %2786 = vmatprep.subr.bf16.mxu0 %v1979
        %2787 = vmatpush1.bf16.msra.mxu0 %v1978
        %2788 = vmatprep.subr.bf16.mxu0 %v1991
        %2789 = vmatpush1.bf16.msra.mxu0 %v1990
        %2790 = vmatprep.subr.bf16.mxu0 %v2003
        %2791 = vmatpush1.bf16.msra.mxu0 %v2002
        %2792 = vmatprep.subr.bf16.mxu0 %v2015
        %2793 = vmatpush1.bf16.msra.mxu0 %v2014
        %2794 = vmatprep.mubr.bf16.mxu0 %v671
        %2795 = vmatmul.mubr.bf16.gmra.mrb[0].mxu0 %v670
        %v2796 = vpop.f32.mrb[0].mxu0
        %v2797 = vadd.f32 %v623, %v2796
        %v2798 = vpop.f32.mrb[0].mxu0
        %v2799 = vadd.f32 %v627, %v2798
        %v2800 = vpop.f32.mrb[0].mxu0
        %v2801 = vpop.f32.mrb[0].mxu0
        %2802 = vdwg.mxu0
        %2803 = vmatprep.subr.bf16.mxu0 %v2027
        %2804 = vmatpush1.bf16.msra.mxu0 %v2026
        %2805 = vmatprep.subr.bf16.mxu0 %v2039
        %2806 = vmatpush1.bf16.msra.mxu0 %v2038
        %2807 = vmatprep.subr.bf16.mxu0 %v2051
        %2808 = vmatpush1.bf16.msra.mxu0 %v2050
        %2809 = vmatprep.subr.bf16.mxu0 %v2063
        %2810 = vmatpush1.bf16.msra.mxu0 %v2062
        %2811 = vmatprep.subr.bf16.mxu0 %v2075
        %2812 = vmatpush1.bf16.msra.mxu0 %v2074
        %2813 = vmatprep.subr.bf16.mxu0 %v2087
        %2814 = vmatpush1.bf16.msra.mxu0 %v2086
        %2815 = vmatprep.subr.bf16.mxu0 %v2099
        %2816 = vmatpush1.bf16.msra.mxu0 %v2098
        %2817 = vmatprep.subr.bf16.mxu0 %v2111
        %2818 = vmatpush1.bf16.msra.mxu0 %v2110
        %2819 = vmatprep.subr.bf16.mxu0 %v2123
        %2820 = vmatpush1.bf16.msra.mxu0 %v2122
        %2821 = vmatprep.subr.bf16.mxu0 %v2135
        %2822 = vmatpush1.bf16.msra.mxu0 %v2134
        %2823 = vmatprep.subr.bf16.mxu0 %v2147
        %2824 = vmatpush1.bf16.msra.mxu0 %v2146
        %2825 = vmatprep.subr.bf16.mxu0 %v2159
        %2826 = vmatpush1.bf16.msra.mxu0 %v2158
        %2827 = vmatprep.subr.bf16.mxu0 %v2171
        %2828 = vmatpush1.bf16.msra.mxu0 %v2170
        %2829 = vmatprep.subr.bf16.mxu0 %v2183
        %2830 = vmatpush1.bf16.msra.mxu0 %v2182
        %2831 = vmatprep.subr.bf16.mxu0 %v2195
        %2832 = vmatpush1.bf16.msra.mxu0 %v2194
        %2833 = vmatprep.subr.bf16.mxu0 %v2207
        %2834 = vmatpush1.bf16.msra.mxu0 %v2206
        %2835 = vmatprep.mubr.bf16.mxu0 %v673
        %2836 = vmatmul.mubr.bf16.gmra.mrb[0].mxu0 %v672
        %v2837 = vpop.f32.mrb[0].mxu0
        %v2838 = vadd.f32 %v2797, %v2837
        %v2839 = vpop.f32.mrb[0].mxu0
        %v2840 = vadd.f32 %v2799, %v2839
        %v2841 = vpop.f32.mrb[0].mxu0
        %v2842 = vpop.f32.mrb[0].mxu0
        %2843 = vdwg.mxu0
        %2844 = vmatprep.subr.bf16.mxu0 %v1837
        %2845 = vmatpush1.bf16.msra.mxu0 %v1836
        %2846 = vmatprep.subr.bf16.mxu0 %v1849
        %2847 = vmatpush1.bf16.msra.mxu0 %v1848
        %2848 = vmatprep.subr.bf16.mxu0 %v1861
        %2849 = vmatpush1.bf16.msra.mxu0 %v1860
        %2850 = vmatprep.subr.bf16.mxu0 %v1873
        %2851 = vmatpush1.bf16.msra.mxu0 %v1872
        %2852 = vmatprep.subr.bf16.mxu0 %v1885
        %2853 = vmatpush1.bf16.msra.mxu0 %v1884
        %2854 = vmatprep.subr.bf16.mxu0 %v1897
        %2855 = vmatpush1.bf16.msra.mxu0 %v1896
        %2856 = vmatprep.subr.bf16.mxu0 %v1909
        %2857 = vmatpush1.bf16.msra.mxu0 %v1908
        %2858 = vmatprep.subr.bf16.mxu0 %v1921
        %2859 = vmatpush1.bf16.msra.mxu0 %v1920
        %2860 = vmatprep.subr.bf16.mxu0 %v1933
        %2861 = vmatpush1.bf16.msra.mxu0 %v1932
        %2862 = vmatprep.subr.bf16.mxu0 %v1945
        %2863 = vmatpush1.bf16.msra.mxu0 %v1944
        %2864 = vmatprep.subr.bf16.mxu0 %v1957
        %2865 = vmatpush1.bf16.msra.mxu0 %v1956
        %2866 = vmatprep.subr.bf16.mxu0 %v1969
        %2867 = vmatpush1.bf16.msra.mxu0 %v1968
        %2868 = vmatprep.subr.bf16.mxu0 %v1981
        %2869 = vmatpush1.bf16.msra.mxu0 %v1980
        %2870 = vmatprep.subr.bf16.mxu0 %v1993
        %2871 = vmatpush1.bf16.msra.mxu0 %v1992
        %2872 = vmatprep.subr.bf16.mxu0 %v2005
        %2873 = vmatpush1.bf16.msra.mxu0 %v2004
        %2874 = vmatprep.subr.bf16.mxu0 %v2017
        %2875 = vmatpush1.bf16.msra.mxu0 %v2016
        %2876 = vmatprep.mubr.bf16.mxu0 %v671
        %2877 = vmatmul.mubr.bf16.gmra.mrb[0].mxu0 %v670
        %v2878 = vpop.f32.mrb[0].mxu0
        %v2879 = vadd.f32 %v631, %v2878
        %v2880 = vpop.f32.mrb[0].mxu0
        %v2881 = vadd.f32 %v635, %v2880
        %v2882 = vpop.f32.mrb[0].mxu0
        %v2883 = vpop.f32.mrb[0].mxu0
        %2884 = vdwg.mxu0
        %2885 = vmatprep.subr.bf16.mxu0 %v2029
        %2886 = vmatpush1.bf16.msra.mxu0 %v2028
        %2887 = vmatprep.subr.bf16.mxu0 %v2041
        %2888 = vmatpush1.bf16.msra.mxu0 %v2040
        %2889 = vmatprep.subr.bf16.mxu0 %v2053
        %2890 = vmatpush1.bf16.msra.mxu0 %v2052
        %2891 = vmatprep.subr.bf16.mxu0 %v2065
        %2892 = vmatpush1.bf16.msra.mxu0 %v2064
        %2893 = vmatprep.subr.bf16.mxu0 %v2077
        %2894 = vmatpush1.bf16.msra.mxu0 %v2076
        %2895 = vmatprep.subr.bf16.mxu0 %v2089
        %2896 = vmatpush1.bf16.msra.mxu0 %v2088
        %2897 = vmatprep.subr.bf16.mxu0 %v2101
        %2898 = vmatpush1.bf16.msra.mxu0 %v2100
        %2899 = vmatprep.subr.bf16.mxu0 %v2113
        %2900 = vmatpush1.bf16.msra.mxu0 %v2112
        %2901 = vmatprep.subr.bf16.mxu0 %v2125
        %2902 = vmatpush1.bf16.msra.mxu0 %v2124
        %2903 = vmatprep.subr.bf16.mxu0 %v2137
        %2904 = vmatpush1.bf16.msra.mxu0 %v2136
        %2905 = vmatprep.subr.bf16.mxu0 %v2149
        %2906 = vmatpush1.bf16.msra.mxu0 %v2148
        %2907 = vmatprep.subr.bf16.mxu0 %v2161
        %2908 = vmatpush1.bf16.msra.mxu0 %v2160
        %2909 = vmatprep.subr.bf16.mxu0 %v2173
        %2910 = vmatpush1.bf16.msra.mxu0 %v2172
        %2911 = vmatprep.subr.bf16.mxu0 %v2185
        %2912 = vmatpush1.bf16.msra.mxu0 %v2184
        %2913 = vmatprep.subr.bf16.mxu0 %v2197
        %2914 = vmatpush1.bf16.msra.mxu0 %v2196
        %2915 = vmatprep.subr.bf16.mxu0 %v2209
        %2916 = vmatpush1.bf16.msra.mxu0 %v2208
        %2917 = vmatprep.mubr.bf16.mxu0 %v673
        %2918 = vmatmul.mubr.bf16.gmra.mrb[0].mxu0 %v672
        %v2919 = vpop.f32.mrb[0].mxu0
        %v2920 = vadd.f32 %v2879, %v2919
        %v2921 = vpop.f32.mrb[0].mxu0
        %v2922 = vadd.f32 %v2881, %v2921
        %v2923 = vpop.f32.mrb[0].mxu0
        %v2924 = vpop.f32.mrb[0].mxu0
        %2925 = vdwg.mxu0
        %2926 = vmatprep.subr.bf16.mxu0 %v1839
        %2927 = vmatpush1.bf16.msra.mxu0 %v1838
        %2928 = vmatprep.subr.bf16.mxu0 %v1851
        %2929 = vmatpush1.bf16.msra.mxu0 %v1850
        %2930 = vmatprep.subr.bf16.mxu0 %v1863
        %2931 = vmatpush1.bf16.msra.mxu0 %v1862
        %2932 = vmatprep.subr.bf16.mxu0 %v1875
        %2933 = vmatpush1.bf16.msra.mxu0 %v1874
        %2934 = vmatprep.subr.bf16.mxu0 %v1887
        %2935 = vmatpush1.bf16.msra.mxu0 %v1886
        %2936 = vmatprep.subr.bf16.mxu0 %v1899
        %2937 = vmatpush1.bf16.msra.mxu0 %v1898
        %2938 = vmatprep.subr.bf16.mxu0 %v1911
        %2939 = vmatpush1.bf16.msra.mxu0 %v1910
        %2940 = vmatprep.subr.bf16.mxu0 %v1923
        %2941 = vmatpush1.bf16.msra.mxu0 %v1922
        %2942 = vmatprep.subr.bf16.mxu0 %v1935
        %2943 = vmatpush1.bf16.msra.mxu0 %v1934
        %2944 = vmatprep.subr.bf16.mxu0 %v1947
        %2945 = vmatpush1.bf16.msra.mxu0 %v1946
        %2946 = vmatprep.subr.bf16.mxu0 %v1959
        %2947 = vmatpush1.bf16.msra.mxu0 %v1958
        %2948 = vmatprep.subr.bf16.mxu0 %v1971
        %2949 = vmatpush1.bf16.msra.mxu0 %v1970
        %2950 = vmatprep.subr.bf16.mxu0 %v1983
        %2951 = vmatpush1.bf16.msra.mxu0 %v1982
        %2952 = vmatprep.subr.bf16.mxu0 %v1995
        %2953 = vmatpush1.bf16.msra.mxu0 %v1994
        %2954 = vmatprep.subr.bf16.mxu0 %v2007
        %2955 = vmatpush1.bf16.msra.mxu0 %v2006
        %2956 = vmatprep.subr.bf16.mxu0 %v2019
        %2957 = vmatpush1.bf16.msra.mxu0 %v2018
        %2958 = vmatprep.mubr.bf16.mxu0 %v671
        %2959 = vmatmul.mubr.bf16.gmra.mrb[0].mxu0 %v670
        %v2960 = vpop.f32.mrb[0].mxu0
        %v2961 = vadd.f32 %v639, %v2960
        %v2962 = vpop.f32.mrb[0].mxu0
        %v2963 = vadd.f32 %v643, %v2962
        %v2964 = vpop.f32.mrb[0].mxu0
        %v2965 = vpop.f32.mrb[0].mxu0
        %2966 = vdwg.mxu0
        %2967 = vmatprep.subr.bf16.mxu0 %v2031
        %2968 = vmatpush1.bf16.msra.mxu0 %v2030
        %2969 = vmatprep.subr.bf16.mxu0 %v2043
        %2970 = vmatpush1.bf16.msra.mxu0 %v2042
        %2971 = vmatprep.subr.bf16.mxu0 %v2055
        %2972 = vmatpush1.bf16.msra.mxu0 %v2054
        %2973 = vmatprep.subr.bf16.mxu0 %v2067
        %2974 = vmatpush1.bf16.msra.mxu0 %v2066
        %2975 = vmatprep.subr.bf16.mxu0 %v2079
        %2976 = vmatpush1.bf16.msra.mxu0 %v2078
        %2977 = vmatprep.subr.bf16.mxu0 %v2091
        %2978 = vmatpush1.bf16.msra.mxu0 %v2090
        %2979 = vmatprep.subr.bf16.mxu0 %v2103
        %2980 = vmatpush1.bf16.msra.mxu0 %v2102
        %2981 = vmatprep.subr.bf16.mxu0 %v2115
        %2982 = vmatpush1.bf16.msra.mxu0 %v2114
        %2983 = vmatprep.subr.bf16.mxu0 %v2127
        %2984 = vmatpush1.bf16.msra.mxu0 %v2126
        %2985 = vmatprep.subr.bf16.mxu0 %v2139
        %2986 = vmatpush1.bf16.msra.mxu0 %v2138
        %2987 = vmatprep.subr.bf16.mxu0 %v2151
        %2988 = vmatpush1.bf16.msra.mxu0 %v2150
        %2989 = vmatprep.subr.bf16.mxu0 %v2163
        %2990 = vmatpush1.bf16.msra.mxu0 %v2162
        %2991 = vmatprep.subr.bf16.mxu0 %v2175
        %2992 = vmatpush1.bf16.msra.mxu0 %v2174
        %2993 = vmatprep.subr.bf16.mxu0 %v2187
        %2994 = vmatpush1.bf16.msra.mxu0 %v2186
        %2995 = vmatprep.subr.bf16.mxu0 %v2199
        %2996 = vmatpush1.bf16.msra.mxu0 %v2198
        %2997 = vmatprep.subr.bf16.mxu0 %v2211
        %2998 = vmatpush1.bf16.msra.mxu0 %v2210
        %2999 = vmatprep.mubr.bf16.mxu0 %v673
        %3000 = vmatmul.mubr.bf16.gmra.mrb[0].mxu0 %v672
        %v3001 = vpop.f32.mrb[0].mxu0
        %v3002 = vadd.f32 %v2961, %v3001
        %v3003 = vpop.f32.mrb[0].mxu0
        %v3004 = vadd.f32 %v2963, %v3003
        %v3005 = vpop.f32.mrb[0].mxu0
        %v3006 = vpop.f32.mrb[0].mxu0
        %3007 = vdwg.mxu0
        %3008 = vmatprep.subr.bf16.mxu0 %v1841
        %3009 = vmatpush1.bf16.msra.mxu0 %v1840
        %3010 = vmatprep.subr.bf16.mxu0 %v1853
        %3011 = vmatpush1.bf16.msra.mxu0 %v1852
        %3012 = vmatprep.subr.bf16.mxu0 %v1865
        %3013 = vmatpush1.bf16.msra.mxu0 %v1864
        %3014 = vmatprep.subr.bf16.mxu0 %v1877
        %3015 = vmatpush1.bf16.msra.mxu0 %v1876
        %3016 = vmatprep.subr.bf16.mxu0 %v1889
        %3017 = vmatpush1.bf16.msra.mxu0 %v1888
        %3018 = vmatprep.subr.bf16.mxu0 %v1901
        %3019 = vmatpush1.bf16.msra.mxu0 %v1900
        %3020 = vmatprep.subr.bf16.mxu0 %v1913
        %3021 = vmatpush1.bf16.msra.mxu0 %v1912
        %3022 = vmatprep.subr.bf16.mxu0 %v1925
        %3023 = vmatpush1.bf16.msra.mxu0 %v1924
        %3024 = vmatprep.subr.bf16.mxu0 %v1937
        %3025 = vmatpush1.bf16.msra.mxu0 %v1936
        %3026 = vmatprep.subr.bf16.mxu0 %v1949
        %3027 = vmatpush1.bf16.msra.mxu0 %v1948
        %3028 = vmatprep.subr.bf16.mxu0 %v1961
        %3029 = vmatpush1.bf16.msra.mxu0 %v1960
        %3030 = vmatprep.subr.bf16.mxu0 %v1973
        %3031 = vmatpush1.bf16.msra.mxu0 %v1972
        %3032 = vmatprep.subr.bf16.mxu0 %v1985
        %3033 = vmatpush1.bf16.msra.mxu0 %v1984
        %3034 = vmatprep.subr.bf16.mxu0 %v1997
        %3035 = vmatpush1.bf16.msra.mxu0 %v1996
        %3036 = vmatprep.subr.bf16.mxu0 %v2009
        %3037 = vmatpush1.bf16.msra.mxu0 %v2008
        %3038 = vmatprep.subr.bf16.mxu0 %v2021
        %3039 = vmatpush1.bf16.msra.mxu0 %v2020
        %3040 = vmatprep.mubr.bf16.mxu0 %v671
        %3041 = vmatmul.mubr.bf16.gmra.mrb[0].mxu0 %v670
        %v3042 = vpop.f32.mrb[0].mxu0
        %v3043 = vadd.f32 %v647, %v3042
        %v3044 = vpop.f32.mrb[0].mxu0
        %v3045 = vadd.f32 %v651, %v3044
        %v3046 = vpop.f32.mrb[0].mxu0
        %v3047 = vpop.f32.mrb[0].mxu0
        %3048 = vdwg.mxu0
        %3049 = vmatprep.subr.bf16.mxu0 %v2033
        %3050 = vmatpush1.bf16.msra.mxu0 %v2032
        %3051 = vmatprep.subr.bf16.mxu0 %v2045
        %3052 = vmatpush1.bf16.msra.mxu0 %v2044
        %3053 = vmatprep.subr.bf16.mxu0 %v2057
        %3054 = vmatpush1.bf16.msra.mxu0 %v2056
        %3055 = vmatprep.subr.bf16.mxu0 %v2069
        %3056 = vmatpush1.bf16.msra.mxu0 %v2068
        %3057 = vmatprep.subr.bf16.mxu0 %v2081
        %3058 = vmatpush1.bf16.msra.mxu0 %v2080
        %3059 = vmatprep.subr.bf16.mxu0 %v2093
        %3060 = vmatpush1.bf16.msra.mxu0 %v2092
        %3061 = vmatprep.subr.bf16.mxu0 %v2105
        %3062 = vmatpush1.bf16.msra.mxu0 %v2104
        %3063 = vmatprep.subr.bf16.mxu0 %v2117
        %3064 = vmatpush1.bf16.msra.mxu0 %v2116
        %3065 = vmatprep.subr.bf16.mxu0 %v2129
        %3066 = vmatpush1.bf16.msra.mxu0 %v2128
        %3067 = vmatprep.subr.bf16.mxu0 %v2141
        %3068 = vmatpush1.bf16.msra.mxu0 %v2140
        %3069 = vmatprep.subr.bf16.mxu0 %v2153
        %3070 = vmatpush1.bf16.msra.mxu0 %v2152
        %3071 = vmatprep.subr.bf16.mxu0 %v2165
        %3072 = vmatpush1.bf16.msra.mxu0 %v2164
        %3073 = vmatprep.subr.bf16.mxu0 %v2177
        %3074 = vmatpush1.bf16.msra.mxu0 %v2176
        %3075 = vmatprep.subr.bf16.mxu0 %v2189
        %3076 = vmatpush1.bf16.msra.mxu0 %v2188
        %3077 = vmatprep.subr.bf16.mxu0 %v2201
        %3078 = vmatpush1.bf16.msra.mxu0 %v2200
        %3079 = vmatprep.subr.bf16.mxu0 %v2213
        %3080 = vmatpush1.bf16.msra.mxu0 %v2212
        %3081 = vmatprep.mubr.bf16.mxu0 %v673
        %3082 = vmatmul.mubr.bf16.gmra.mrb[0].mxu0 %v672
        %v3083 = vpop.f32.mrb[0].mxu0
        %v3084 = vadd.f32 %v3043, %v3083
        %v3085 = vpop.f32.mrb[0].mxu0
        %v3086 = vadd.f32 %v3045, %v3085
        %v3087 = vpop.f32.mrb[0].mxu0
        %v3088 = vpop.f32.mrb[0].mxu0
        %3089 = vdwg.mxu0
        %v3090 = vpack.c.bf16 %v2674, %v2674
        %v3091 = vpack.c.bf16 %v2676, %v2676
        %v3092 = vpack.c.bf16 %v2756, %v2756
        %v3093 = vpack.c.bf16 %v2758, %v2758
        %v3094 = vpack.c.bf16 %v2838, %v2838
        %v3095 = vpack.c.bf16 %v2840, %v2840
        %v3096 = vpack.c.bf16 %v2920, %v2920
        %v3097 = vpack.c.bf16 %v2922, %v2922
        %v3098 = vpack.c.bf16 %v3002, %v3002
        %v3099 = vpack.c.bf16 %v3004, %v3004
        %v3100 = vpack.c.bf16 %v3084, %v3084
        %v3101 = vpack.c.bf16 %v3086, %v3086
        %v3114 = vunpack.c.l.b16 %v3090
        %v3115 = vunpack.c.l.b16 %v3091
        %v3116 = vunpack.c.l.b16 %v3092
        %v3117 = vunpack.c.l.b16 %v3093
        %v3118 = vunpack.c.l.b16 %v3094
        %v3119 = vunpack.c.l.b16 %v3095
        %v3120 = vunpack.c.l.b16 %v3096
        %v3121 = vunpack.c.l.b16 %v3097
        %v3122 = vunpack.c.l.b16 %v3098
        %v3123 = vunpack.c.l.b16 %v3099
        %v3124 = vunpack.c.l.b16 %v3100
        %v3125 = vunpack.c.l.b16 %v3101
        %v3126 = vpack.c.b16 %v3115, %v3114
        %v3127 = vpack.c.b16 %v3117, %v3116
        %v3128 = vpack.c.b16 %v3119, %v3118
        %v3129 = vpack.c.b16 %v3121, %v3120
        %v3130 = vpack.c.b16 %v3123, %v3122
        %v3131 = vpack.c.b16 %v3125, %v3124
        %3138 = vst [vmem:[%s213] sm:$0xff] %v3126
        %3139 = vst [vmem:[%s213 + $0x8] sm:$0xff] %v3127
        %3140 = vst [vmem:[%s213 + $0x10] sm:$0xff] %v3128
        %3141 = vst [vmem:[%s213 + $0x18] sm:$0xff] %v3129
        %3142 = vst [vmem:[%s213 + $0x20] sm:$0xff] %v3130
        %3143 = vst [vmem:[%s213 + $0x28] sm:$0xff] %v3131
        %s3144 = sand.u32 %s97, 1
        %s3145 = scalar_lea.sflag [#allocation4], %s3144
        %s3146 = sand.u32 %s97, 1
        %s3147 = smul.addr %s3146, 48
        %s3148 = scalar_lea.vmem [#allocation8], %s3147
        // Predicated region
        $region45: #{tpu_custom_call.1} parent=31 // pred_check
          %p3149 = pneg %p107
        $region46: #{tpu_custom_call.1} parent=31 // pred_check_branch
          %3151 = sbr.rel (%p3149) target = $region48
        $region47: #{tpu_custom_call.1} parent=31 // pred_region
          %s3153 = ssub.s32 768, 768
          %3154 = vsyncadd %s3145, %s3153
          %s3155 = smul.addr %s21, 12
          %s3156 = smul.addr %s3155, 64
          %s3157 = scalar_lea.hbm %s3, %s3156
          %s3159 = sshll.u32 %s3148, 4
          %s3160 = int_to_ptr.vmem [resolvable:$true] %s3159
          %3162 = dma.vmem_to_hbm [thread:$0]  %s3160, 768, %s3157, %s3145
        $region48: #{tpu_custom_call.1} parent=31 // pred_fallthru
          _
      $region32: #{tpu_custom_call.1} parent=5 // pred_fallthru
        _
      %p3163 = scmp.le.s32.totalorder 2, %s16
      // Predicated region
      $region49: #{tpu_custom_call.1} parent=5 // pred_check
        %p3164 = pneg %p3163
      $region50: #{tpu_custom_call.1} parent=5 // pred_check_branch
        %3166 = sbr.rel (%p3164) target = $region52
      $region51: #{tpu_custom_call.1} parent=5 // pred_region
        %s3167 = ssub.s32 %s16, 2
        // Predicated region
        $region53: #{tpu_custom_call.1} parent=51 // pred_check
          %p3168 = pneg %p113
        $region54: #{tpu_custom_call.1} parent=51 // pred_check_branch
          %3170 = sbr.rel (%p3168) target = $region56
        $region55: #{tpu_custom_call.1} parent=51 // pred_region
          %s3171 = sand.u32 %s98, 1
          %s3172 = scalar_lea.sflag [#allocation4], %s3171
          %s3173 = sand.u32 %s98, 1
          %s3174 = smul.addr %s3173, 48
          %s3175 = scalar_lea.vmem [#allocation8], %s3174
          %3176 = dma.done %s3172, 768
        $region56: #{tpu_custom_call.1} parent=51 // pred_fallthru
          _
      $region52: #{tpu_custom_call.1} parent=5 // pred_fallthru
        _
    $region6: #{tpu_custom_call.1} parent=1 // loop_footer
      %s20 = sadd.s32 1, %s16
    $region7: #{tpu_custom_call.1} parent=1 // loop_footer_branch
      %15 = sbr.rel target = $region3
    $region8: #{tpu_custom_call.1} parent=1 // loop_exit
      _
    %3177 = vsyncpa [#allocation3], 1
    %s3178 = scalar_lea.sflag [#allocation3], 1
    %3179 = vsyncpa %s3178, 1
    %3180 = vsyncpa [#allocation6], 1
    %3181 = vsyncpa [#allocation4], 1
    %s3182 = scalar_lea.sflag [#allocation4], 1
    %3183 = vsyncpa %s3182, 1

</llo_original>
